<compile_context>
chip_gen: v5e
topology: v5e:2x2
jax: 0.10.0
libtpu: 0.0.40
codegen_flags: <defaults>
</compile_context>

<pallas_src>
import jax
import jax.numpy as jnp
import numpy as np
from jax.experimental import pallas as pl
from jax.experimental.pallas import tpu as pltpu


# --------------------------------------------------------------------------- #
# helpers
# --------------------------------------------------------------------------- #
def _round_up(n, m):
    return ((n + m - 1) // m) * m


def _pad_to(a, shape):
    pads = [(0, t - s) for s, t in zip(a.shape, shape)]
    if all(p == (0, 0) for p in pads):
        return a
    return jnp.pad(a, pads)


def _elu(x):
    # ELU(alpha=1): x if x > 0 else exp(x) - 1.
    # exp is the EUP-native transcendental (one push/element); kept as a select
    # (never multiply-by-mask) so the unselected branch cannot leak inf/nan.
    one = jnp.asarray(1.0, dtype=x.dtype)
    return jnp.where(x > 0, x, jnp.exp(x) - one)


def _vmem_cap_bytes():
    """Generation-aware VMEM budget: ~75% of physical (96 MiB on v5e/v6e,
    48 MiB on v7x); conservative 48 MiB if the query is unavailable."""
    try:
        return int(0.75 * pltpu.get_tpu_info().vmem_capacity_bytes)
    except Exception:
        return 48 * 1024 * 1024


def _elu_dtype():
    """bf16 elementwise/transcendentals only on bf16-VPU/EUP chips (v6e/v7x);
    f32 (always correct) on v5e and older or if detection fails."""
    try:
        kind = jax.devices()[0].device_kind.lower()
    except Exception:
        return jnp.float32
    if any(v in kind for v in ("v2", "v3", "v4", "v5")):
        return jnp.float32
    return jnp.bfloat16 if "tpu" in kind or "v6" in kind or "v7" in kind else jnp.float32


# --------------------------------------------------------------------------- #
# kernel
# --------------------------------------------------------------------------- #
def _make_mlp_kernel(n_sub, sub_m, elu_dtype):
    """Fused 3-layer MLP over one (tm, E) row tile, split into `n_sub`
    independent row sub-blocks so the scheduler can hide the bias/ELU/cast
    epilogue of one sub-block under the matmuls of the next."""

    def kernel(x_ref, w1_ref, b1_ref, w2_ref, b2_ref, w3_ref, b3_ref, o_ref):
        # Hoist grid-invariant loads out of the sub-block loop.
        w1 = w1_ref[...]
        w2 = w2_ref[...]
        w3 = w3_ref[...]
        b1 = b1_ref[...]
        b2 = b2_ref[...]
        b3 = b3_ref[...]

        for k in range(n_sub):                      # static unroll -> independent chains
            r = k * sub_m                           # static offset (multiple of 8)
            x = x_ref[pl.ds(r, sub_m), :]

            h1 = jnp.dot(x, w1, preferred_element_type=jnp.float32) + b1
            h1 = _elu(h1.astype(elu_dtype)).astype(jnp.bfloat16)

            h2 = jnp.dot(h1, w2, preferred_element_type=jnp.float32) + b2
            h2 = _elu(h2.astype(elu_dtype)).astype(jnp.bfloat16)

            out = jnp.dot(h2, w3, preferred_element_type=jnp.float32) + b3
            o_ref[pl.ds(r, sub_m), :] = out.astype(o_ref.dtype)

    return kernel


# --------------------------------------------------------------------------- #
# param packing (one-time) and forward
# --------------------------------------------------------------------------- #
def pack_params(params):
    """One-time packing: zero-pad every feature dim to a multiple of 128 and
    pre-cast weights to bf16 (MXU operands) / biases to f32, so the forward
    path starts directly with the Pallas call (no per-call pad/convert)."""
    w1, b1, w2, b2, w3, b3 = (params[k] for k in ("w1", "b1", "w2", "b2", "w3", "b3"))
    E, H1 = w1.shape
    H2, T = w2.shape[1], w3.shape[1]
    E_p, H1_p, H2_p, T_p = (_round_up(d, 128) for d in (E, H1, H2, T))
    return {
        "w1": _pad_to(w1.astype(jnp.bfloat16), (E_p, H1_p)),
        "w2": _pad_to(w2.astype(jnp.bfloat16), (H1_p, H2_p)),
        "w3": _pad_to(w3.astype(jnp.bfloat16), (H2_p, T_p)),
        "b1": _pad_to(b1.astype(jnp.float32), (1, H1_p)),
        "b2": _pad_to(b2.astype(jnp.float32), (1, H2_p)),
        "b3": _pad_to(b3.astype(jnp.float32), (1, T_p)),
        "dims": (E, H1, H2, T),
        "padded_dims": (E_p, H1_p, H2_p, T_p),
    }


def _jax_forward(x, packed):
    """Pure-XLA fallback (same bf16-operand / f32-accumulate math) used when
    the resident-weight fused kernel would not fit in the VMEM budget."""
    E_p = packed["padded_dims"][0]
    T = packed["dims"][3]
    elu_dtype = _elu_dtype()
    xb = _pad_to(x.astype(jnp.bfloat16), (x.shape[0], E_p))
    h = jnp.dot(xb, packed["w1"], preferred_element_type=jnp.float32) + packed["b1"]
    h = _elu(h.astype(elu_dtype)).astype(jnp.bfloat16)
    h = jnp.dot(h, packed["w2"], preferred_element_type=jnp.float32) + packed["b2"]
    h = _elu(h.astype(elu_dtype)).astype(jnp.bfloat16)
    out = jnp.dot(h, packed["w3"], preferred_element_type=jnp.float32) + packed["b3"]
    return out[:, :T]


def projection_layer_forward(x, packed, *, tm=512, n_sub=4):
    """x: [B, E] float32.  packed: output of pack_params()."""
    E, H1, H2, T = packed["dims"]
    E_p, H1_p, H2_p, T_p = packed["padded_dims"]
    B = x.shape[0]
    assert x.shape[1] == E, (x.shape, E)

    # ---- row tiling: sub_m multiple of 8; >= 2 and preferably an EVEN number
    # of grid steps (v7x shards the 'parallel' axis over 2 TensorCores). ----
    quantum = 8 * n_sub
    B_q = _round_up(B, quantum)
    tm = min(_round_up(max(tm, quantum), quantum), B_q)
    n_tiles = pl.cdiv(B_q, tm)
    if n_tiles == 1 and B_q > quantum:
        tm = _round_up(pl.cdiv(B_q, 2), quantum)
    elif n_tiles > 2 and n_tiles % 2 == 1:
        tm = _round_up(pl.cdiv(B_q, n_tiles + 1), quantum)
    n_tiles = pl.cdiv(B_q, tm)
    B_p = n_tiles * tm
    sub_m = tm // n_sub

    # ---- VMEM budget: resident weights + double-buffered x/out tiles +
    # f32/bf16 intermediates, with headroom, capped per chip generation. ----
    weight_bytes = 2 * (E_p * H1_p + H1_p * H2_p + H2_p * T_p) + 4 * (H1_p + H2_p + T_p)
    io_bytes = 2 * tm * E_p * 2 + 2 * tm * T_p * 4
    interm_bytes = tm * (H1_p + H2_p) * 4 + tm * max(H1_p, H2_p) * 2
    needed = weight_bytes + io_bytes + interm_bytes
    cap = _vmem_cap_bytes()
    if int(1.2 * needed) > cap:
        # TODO(synk): add an N/K-tiled weight path for models whose padded
        # weights exceed the resident-VMEM budget; fall back to XLA for now.
        return _jax_forward(x, packed)
    vmem_limit = min(cap, max(int(1.5 * needed), 32 * 1024 * 1024))

    elu_dtype = _elu_dtype()
    kernel = _make_mlp_kernel(n_sub, sub_m, elu_dtype)

    # Activation tile in bf16 (MXU operand); only this is pipelined.
    x_p = _pad_to(x.astype(jnp.bfloat16), (B_p, E_p))

    # Grid-invariant weights/biases -> single resident VMEM copy.
    def resident():
        return pl.BlockSpec(memory_space=pltpu.MemorySpace.VMEM)

    cost = pl.CostEstimate(
        flops=2 * B_p * (E_p * H1_p + H1_p * H2_p + H2_p * T_p),
        transcendentals=B_p * (H1_p + H2_p),
        bytes_accessed=B_p * E_p * 2 + B_p * T_p * 4 + weight_bytes,
    )

    out = pl.pallas_call(
        kernel,
        out_shape=jax.ShapeDtypeStruct((B_p, T_p), jnp.float32),
        grid_spec=pltpu.PrefetchScalarGridSpec(
            num_scalar_prefetch=0,
            grid=(n_tiles,),
            in_specs=[
                pl.BlockSpec((tm, E_p), lambda i: (i, 0)),  # x tile (pipelined)
                resident(), resident(),                      # layer 1: w1, b1
                resident(), resident(),                      # layer 2: w2, b2
                resident(), resident(),                      # layer 3: w3, b3
            ],
            out_specs=pl.BlockSpec((tm, T_p), lambda i: (i, 0)),
        ),
        compiler_params=pltpu.CompilerParams(
            dimension_semantics=("parallel",),
            vmem_limit_bytes=vmem_limit,
        ),
        cost_estimate=cost,
    )(x_p, packed["w1"], packed["b1"], packed["w2"], packed["b2"],
      packed["w3"], packed["b3"])

    # Slice padding (batch rows + output lanes) off outside the kernel.
    return out[:B, :T]


# --------------------------------------------------------------------------- #
# init + reference
# --------------------------------------------------------------------------- #
def init_params(key, emb_size, hidden_sizes, target_size, dtype=jnp.float32):
    """Deterministic PyTorch-style (uniform +-1/sqrt(fan_in)) initialization."""
    dims = [emb_size, hidden_sizes[0], hidden_sizes[1], target_size]
    params = {}
    for idx in range(3):
        fan_in, fan_out = dims[idx], dims[idx + 1]
        key, kw, kb = jax.random.split(key, 3)
        bound = 1.0 / np.sqrt(fan_in)
        params[f"w{idx + 1}"] = jax.random.uniform(
            kw, (fan_in, fan_out), dtype, minval=-bound, maxval=bound
        )
        params[f"b{idx + 1}"] = jax.random.uniform(
            kb, (1, fan_out), dtype, minval=-bound, maxval=bound
        )
    return params


def reference_forward(x, params, elu_dtype=jnp.float32):
    """Pure-JAX reference mirroring the kernel math (bf16 operands, f32 acc,
    ELU in elu_dtype)."""
    def dot(a, w):
        return jnp.dot(a.astype(jnp.bfloat16), w.astype(jnp.bfloat16),
                       preferred_element_type=jnp.float32)

    h = _elu((dot(x, params["w1"]) + params["b1"]).astype(elu_dtype)).astype(jnp.float32)
    h = _elu((dot(h, params["w2"]) + params["b2"]).astype(elu_dtype)).astype(jnp.float32)
    return dot(h, params["w3"]) + params["b3"].astype(jnp.float32)


# --------------------------------------------------------------------------- #
# demo / self-test
# --------------------------------------------------------------------------- #
if __name__ == "__main__":
    # Small stand-ins for the module defaults (emb=300, hidden=(1024, 512),
    # target=300): non-128-multiple feature dims exercise the lane-padding path
    # and a non-tile-multiple batch exercises the row-padding path.
    B, E, H1, H2, T = 200, 300, 192, 96, 300

    key = jax.random.PRNGKey(0)
    key, kx = jax.random.split(key)
    x = jax.random.normal(kx, (B, E), jnp.float32)
    params = init_params(key, E, (H1, H2), T)

    packed = pack_params(params)                 # one-time pad + cast
    out = projection_layer_forward(x, packed)    # grid = (2,) "parallel" steps
    out = jax.block_until_ready(out)

    ref = reference_forward(x, params, elu_dtype=_elu_dtype())
    np.testing.assert_allclose(np.asarray(out), np.asarray(ref), rtol=1e-2, atol=1e-2)

    # TODO(synk): train_and_evaluate / save are host-side training-loop code
    # (optimizer, scheduler, checkpointing) and are out of scope for a forward
    # kernel.
    print("KERNEL_OK")
</pallas_src>

<mosaic_0001>
module attributes {stable_mosaic.version = 11 : i64} {
  func.func @kernel(%arg0: i32, %arg1: memref<128x384xbf16, #tpu.memory_space<vmem>>, %arg2: memref<384x256xbf16, #tpu.memory_space<vmem>>, %arg3: memref<1x256xf32, #tpu.memory_space<vmem>>, %arg4: memref<256x128xbf16, #tpu.memory_space<vmem>>, %arg5: memref<1x128xf32, #tpu.memory_space<vmem>>, %arg6: memref<128x384xbf16, #tpu.memory_space<vmem>>, %arg7: memref<1x384xf32, #tpu.memory_space<vmem>>, %arg8: memref<128x384xf32, #tpu.memory_space<vmem>>) attributes {dimension_semantics = [#tpu.dimension_semantics<parallel>], iteration_bounds = array<i64: 2>, scalar_prefetch = 0 : i64, scratch_operands = 0 : i64, tpu.core_type = #tpu.core_type<tc>, window_params = [{transform_indices = @transform_0, window_bounds = array<i64: 128, 384>}, {pipeline_mode = #tpu.pipeline_mode<synchronous>, transform_indices = @transform_1, window_bounds = array<i64: 384, 256>}, {pipeline_mode = #tpu.pipeline_mode<synchronous>, transform_indices = @transform_2, window_bounds = array<i64: 1, 256>}, {pipeline_mode = #tpu.pipeline_mode<synchronous>, transform_indices = @transform_3, window_bounds = array<i64: 256, 128>}, {pipeline_mode = #tpu.pipeline_mode<synchronous>, transform_indices = @transform_4, window_bounds = array<i64: 1, 128>}, {pipeline_mode = #tpu.pipeline_mode<synchronous>, transform_indices = @transform_5, window_bounds = array<i64: 128, 384>}, {pipeline_mode = #tpu.pipeline_mode<synchronous>, transform_indices = @transform_6, window_bounds = array<i64: 1, 384>}, {transform_indices = @transform_7, window_bounds = array<i64: 128, 384>}]} {
    %c0 = arith.constant 0 : index
    %c0_0 = arith.constant 0 : index
    %0 = vector.load %arg2[%c0, %c0_0] : memref<384x256xbf16, #tpu.memory_space<vmem>>, vector<384x256xbf16>
    %c0_1 = arith.constant 0 : index
    %c0_2 = arith.constant 0 : index
    %1 = vector.load %arg4[%c0_1, %c0_2] : memref<256x128xbf16, #tpu.memory_space<vmem>>, vector<256x128xbf16>
    %c0_3 = arith.constant 0 : index
    %c0_4 = arith.constant 0 : index
    %2 = vector.load %arg6[%c0_3, %c0_4] : memref<128x384xbf16, #tpu.memory_space<vmem>>, vector<128x384xbf16>
    %c0_5 = arith.constant 0 : index
    %c0_6 = arith.constant 0 : index
    %3 = vector.load %arg3[%c0_5, %c0_6] : memref<1x256xf32, #tpu.memory_space<vmem>>, vector<1x256xf32>
    %c0_7 = arith.constant 0 : index
    %c0_8 = arith.constant 0 : index
    %4 = vector.load %arg5[%c0_7, %c0_8] : memref<1x128xf32, #tpu.memory_space<vmem>>, vector<1x128xf32>
    %c0_9 = arith.constant 0 : index
    %c0_10 = arith.constant 0 : index
    %5 = vector.load %arg7[%c0_9, %c0_10] : memref<1x384xf32, #tpu.memory_space<vmem>>, vector<1x384xf32>
    %c0_11 = arith.constant 0 : index
    %c0_12 = arith.constant 0 : index
    %6 = vector.load %arg1[%c0_11, %c0_12] : memref<128x384xbf16, #tpu.memory_space<vmem>>, vector<32x384xbf16>
    %cst = arith.constant dense<0.000000e+00> : vector<32x256xf32>
    %7 = tpu.matmul %6, %0, %cst {dimension_numbers = #tpu.dot_dimension_numbers<[1], [0], [0], [1], [0, 0, 1, 1], [], []>} : vector<32x384xbf16>, vector<384x256xbf16>, vector<32x256xf32> -> vector<32x256xf32>
    %8 = vector.broadcast %3 : vector<1x256xf32> to vector<32x256xf32>
    %9 = arith.addf %7, %8 : vector<32x256xf32>
    %cst_13 = arith.constant 0.000000e+00 : f32
    %10 = vector.broadcast %cst_13 : f32 to vector<32x256xf32>
    %11 = arith.cmpf ogt, %9, %10 : vector<32x256xf32>
    %12 = math.exp %9 : vector<32x256xf32>
    %cst_14 = arith.constant 1.000000e+00 : f32
    %13 = vector.broadcast %cst_14 : f32 to vector<32x256xf32>
    %14 = arith.subf %12, %13 : vector<32x256xf32>
    %15 = arith.select %11, %9, %14 : vector<32x256xi1>, vector<32x256xf32>
    %16 = arith.truncf %15 : vector<32x256xf32> to vector<32x256xbf16>
    %cst_15 = arith.constant dense<0.000000e+00> : vector<32x128xf32>
    %17 = tpu.matmul %16, %1, %cst_15 {dimension_numbers = #tpu.dot_dimension_numbers<[1], [0], [0], [1], [0, 0, 1, 1], [], []>} : vector<32x256xbf16>, vector<256x128xbf16>, vector<32x128xf32> -> vector<32x128xf32>
    %18 = vector.broadcast %4 : vector<1x128xf32> to vector<32x128xf32>
    %19 = arith.addf %17, %18 : vector<32x128xf32>
    %cst_16 = arith.constant 0.000000e+00 : f32
    %20 = vector.broadcast %cst_16 : f32 to vector<32x128xf32>
    %21 = arith.cmpf ogt, %19, %20 : vector<32x128xf32>
    %22 = math.exp %19 : vector<32x128xf32>
    %cst_17 = arith.constant 1.000000e+00 : f32
    %23 = vector.broadcast %cst_17 : f32 to vector<32x128xf32>
    %24 = arith.subf %22, %23 : vector<32x128xf32>
    %25 = arith.select %21, %19, %24 : vector<32x128xi1>, vector<32x128xf32>
    %26 = arith.truncf %25 : vector<32x128xf32> to vector<32x128xbf16>
    %cst_18 = arith.constant dense<0.000000e+00> : vector<32x384xf32>
    %27 = tpu.matmul %26, %2, %cst_18 {dimension_numbers = #tpu.dot_dimension_numbers<[1], [0], [0], [1], [0, 0, 1, 1], [], []>} : vector<32x128xbf16>, vector<128x384xbf16>, vector<32x384xf32> -> vector<32x384xf32>
    %28 = vector.broadcast %5 : vector<1x384xf32> to vector<32x384xf32>
    %29 = arith.addf %27, %28 : vector<32x384xf32>
    %c0_19 = arith.constant 0 : index
    %c0_20 = arith.constant 0 : index
    %30 = vector.load %arg8[%c0_19, %c0_20] : memref<128x384xf32, #tpu.memory_space<vmem>>, vector<32x384xf32>
    tpu.vector_store %arg8[%c0_19, %c0_20], %29 {strides = array<i32>} : memref<128x384xf32, #tpu.memory_space<vmem>>, vector<32x384xf32>,
    %c32 = arith.constant 32 : index
    %c0_21 = arith.constant 0 : index
    %31 = vector.load %arg1[%c32, %c0_21] : memref<128x384xbf16, #tpu.memory_space<vmem>>, vector<32x384xbf16>
    %cst_22 = arith.constant dense<0.000000e+00> : vector<32x256xf32>
    %32 = tpu.matmul %31, %0, %cst_22 {dimension_numbers = #tpu.dot_dimension_numbers<[1], [0], [0], [1], [0, 0, 1, 1], [], []>} : vector<32x384xbf16>, vector<384x256xbf16>, vector<32x256xf32> -> vector<32x256xf32>
    %33 = vector.broadcast %3 : vector<1x256xf32> to vector<32x256xf32>
    %34 = arith.addf %32, %33 : vector<32x256xf32>
    %cst_23 = arith.constant 0.000000e+00 : f32
    %35 = vector.broadcast %cst_23 : f32 to vector<32x256xf32>
    %36 = arith.cmpf ogt, %34, %35 : vector<32x256xf32>
    %37 = math.exp %34 : vector<32x256xf32>
    %cst_24 = arith.constant 1.000000e+00 : f32
    %38 = vector.broadcast %cst_24 : f32 to vector<32x256xf32>
    %39 = arith.subf %37, %38 : vector<32x256xf32>
    %40 = arith.select %36, %34, %39 : vector<32x256xi1>, vector<32x256xf32>
    %41 = arith.truncf %40 : vector<32x256xf32> to vector<32x256xbf16>
    %cst_25 = arith.constant dense<0.000000e+00> : vector<32x128xf32>
    %42 = tpu.matmul %41, %1, %cst_25 {dimension_numbers = #tpu.dot_dimension_numbers<[1], [0], [0], [1], [0, 0, 1, 1], [], []>} : vector<32x256xbf16>, vector<256x128xbf16>, vector<32x128xf32> -> vector<32x128xf32>
    %43 = vector.broadcast %4 : vector<1x128xf32> to vector<32x128xf32>
    %44 = arith.addf %42, %43 : vector<32x128xf32>
    %cst_26 = arith.constant 0.000000e+00 : f32
    %45 = vector.broadcast %cst_26 : f32 to vector<32x128xf32>
    %46 = arith.cmpf ogt, %44, %45 : vector<32x128xf32>
    %47 = math.exp %44 : vector<32x128xf32>
    %cst_27 = arith.constant 1.000000e+00 : f32
    %48 = vector.broadcast %cst_27 : f32 to vector<32x128xf32>
    %49 = arith.subf %47, %48 : vector<32x128xf32>
    %50 = arith.select %46, %44, %49 : vector<32x128xi1>, vector<32x128xf32>
    %51 = arith.truncf %50 : vector<32x128xf32> to vector<32x128xbf16>
    %cst_28 = arith.constant dense<0.000000e+00> : vector<32x384xf32>
    %52 = tpu.matmul %51, %2, %cst_28 {dimension_numbers = #tpu.dot_dimension_numbers<[1], [0], [0], [1], [0, 0, 1, 1], [], []>} : vector<32x128xbf16>, vector<128x384xbf16>, vector<32x384xf32> -> vector<32x384xf32>
    %53 = vector.broadcast %5 : vector<1x384xf32> to vector<32x384xf32>
    %54 = arith.addf %52, %53 : vector<32x384xf32>
    %c32_29 = arith.constant 32 : index
    %c0_30 = arith.constant 0 : index
    %55 = vector.load %arg8[%c32_29, %c0_30] : memref<128x384xf32, #tpu.memory_space<vmem>>, vector<32x384xf32>
    tpu.vector_store %arg8[%c32_29, %c0_30], %54 {strides = array<i32>} : memref<128x384xf32, #tpu.memory_space<vmem>>, vector<32x384xf32>,
    %c64 = arith.constant 64 : index
    %c0_31 = arith.constant 0 : index
    %56 = vector.load %arg1[%c64, %c0_31] : memref<128x384xbf16, #tpu.memory_space<vmem>>, vector<32x384xbf16>
    %cst_32 = arith.constant dense<0.000000e+00> : vector<32x256xf32>
    %57 = tpu.matmul %56, %0, %cst_32 {dimension_numbers = #tpu.dot_dimension_numbers<[1], [0], [0], [1], [0, 0, 1, 1], [], []>} : vector<32x384xbf16>, vector<384x256xbf16>, vector<32x256xf32> -> vector<32x256xf32>
    %58 = vector.broadcast %3 : vector<1x256xf32> to vector<32x256xf32>
    %59 = arith.addf %57, %58 : vector<32x256xf32>
    %cst_33 = arith.constant 0.000000e+00 : f32
    %60 = vector.broadcast %cst_33 : f32 to vector<32x256xf32>
    %61 = arith.cmpf ogt, %59, %60 : vector<32x256xf32>
    %62 = math.exp %59 : vector<32x256xf32>
    %cst_34 = arith.constant 1.000000e+00 : f32
    %63 = vector.broadcast %cst_34 : f32 to vector<32x256xf32>
    %64 = arith.subf %62, %63 : vector<32x256xf32>
    %65 = arith.select %61, %59, %64 : vector<32x256xi1>, vector<32x256xf32>
    %66 = arith.truncf %65 : vector<32x256xf32> to vector<32x256xbf16>
    %cst_35 = arith.constant dense<0.000000e+00> : vector<32x128xf32>
    %67 = tpu.matmul %66, %1, %cst_35 {dimension_numbers = #tpu.dot_dimension_numbers<[1], [0], [0], [1], [0, 0, 1, 1], [], []>} : vector<32x256xbf16>, vector<256x128xbf16>, vector<32x128xf32> -> vector<32x128xf32>
    %68 = vector.broadcast %4 : vector<1x128xf32> to vector<32x128xf32>
    %69 = arith.addf %67, %68 : vector<32x128xf32>
    %cst_36 = arith.constant 0.000000e+00 : f32
    %70 = vector.broadcast %cst_36 : f32 to vector<32x128xf32>
    %71 = arith.cmpf ogt, %69, %70 : vector<32x128xf32>
    %72 = math.exp %69 : vector<32x128xf32>
    %cst_37 = arith.constant 1.000000e+00 : f32
    %73 = vector.broadcast %cst_37 : f32 to vector<32x128xf32>
    %74 = arith.subf %72, %73 : vector<32x128xf32>
    %75 = arith.select %71, %69, %74 : vector<32x128xi1>, vector<32x128xf32>
    %76 = arith.truncf %75 : vector<32x128xf32> to vector<32x128xbf16>
    %cst_38 = arith.constant dense<0.000000e+00> : vector<32x384xf32>
    %77 = tpu.matmul %76, %2, %cst_38 {dimension_numbers = #tpu.dot_dimension_numbers<[1], [0], [0], [1], [0, 0, 1, 1], [], []>} : vector<32x128xbf16>, vector<128x384xbf16>, vector<32x384xf32> -> vector<32x384xf32>
    %78 = vector.broadcast %5 : vector<1x384xf32> to vector<32x384xf32>
    %79 = arith.addf %77, %78 : vector<32x384xf32>
    %c64_39 = arith.constant 64 : index
    %c0_40 = arith.constant 0 : index
    %80 = vector.load %arg8[%c64_39, %c0_40] : memref<128x384xf32, #tpu.memory_space<vmem>>, vector<32x384xf32>
    tpu.vector_store %arg8[%c64_39, %c0_40], %79 {strides = array<i32>} : memref<128x384xf32, #tpu.memory_space<vmem>>, vector<32x384xf32>,
    %c96 = arith.constant 96 : index
    %c0_41 = arith.constant 0 : index
    %81 = vector.load %arg1[%c96, %c0_41] : memref<128x384xbf16, #tpu.memory_space<vmem>>, vector<32x384xbf16>
    %cst_42 = arith.constant dense<0.000000e+00> : vector<32x256xf32>
    %82 = tpu.matmul %81, %0, %cst_42 {dimension_numbers = #tpu.dot_dimension_numbers<[1], [0], [0], [1], [0, 0, 1, 1], [], []>} : vector<32x384xbf16>, vector<384x256xbf16>, vector<32x256xf32> -> vector<32x256xf32>
    %83 = vector.broadcast %3 : vector<1x256xf32> to vector<32x256xf32>
    %84 = arith.addf %82, %83 : vector<32x256xf32>
    %cst_43 = arith.constant 0.000000e+00 : f32
    %85 = vector.broadcast %cst_43 : f32 to vector<32x256xf32>
    %86 = arith.cmpf ogt, %84, %85 : vector<32x256xf32>
    %87 = math.exp %84 : vector<32x256xf32>
    %cst_44 = arith.constant 1.000000e+00 : f32
    %88 = vector.broadcast %cst_44 : f32 to vector<32x256xf32>
    %89 = arith.subf %87, %88 : vector<32x256xf32>
    %90 = arith.select %86, %84, %89 : vector<32x256xi1>, vector<32x256xf32>
    %91 = arith.truncf %90 : vector<32x256xf32> to vector<32x256xbf16>
    %cst_45 = arith.constant dense<0.000000e+00> : vector<32x128xf32>
    %92 = tpu.matmul %91, %1, %cst_45 {dimension_numbers = #tpu.dot_dimension_numbers<[1], [0], [0], [1], [0, 0, 1, 1], [], []>} : vector<32x256xbf16>, vector<256x128xbf16>, vector<32x128xf32> -> vector<32x128xf32>
    %93 = vector.broadcast %4 : vector<1x128xf32> to vector<32x128xf32>
    %94 = arith.addf %92, %93 : vector<32x128xf32>
    %cst_46 = arith.constant 0.000000e+00 : f32
    %95 = vector.broadcast %cst_46 : f32 to vector<32x128xf32>
    %96 = arith.cmpf ogt, %94, %95 : vector<32x128xf32>
    %97 = math.exp %94 : vector<32x128xf32>
    %cst_47 = arith.constant 1.000000e+00 : f32
    %98 = vector.broadcast %cst_47 : f32 to vector<32x128xf32>
    %99 = arith.subf %97, %98 : vector<32x128xf32>
    %100 = arith.select %96, %94, %99 : vector<32x128xi1>, vector<32x128xf32>
    %101 = arith.truncf %100 : vector<32x128xf32> to vector<32x128xbf16>
    %cst_48 = arith.constant dense<0.000000e+00> : vector<32x384xf32>
    %102 = tpu.matmul %101, %2, %cst_48 {dimension_numbers = #tpu.dot_dimension_numbers<[1], [0], [0], [1], [0, 0, 1, 1], [], []>} : vector<32x128xbf16>, vector<128x384xbf16>, vector<32x384xf32> -> vector<32x384xf32>
    %103 = vector.broadcast %5 : vector<1x384xf32> to vector<32x384xf32>
    %104 = arith.addf %102, %103 : vector<32x384xf32>
    %c96_49 = arith.constant 96 : index
    %c0_50 = arith.constant 0 : index
    %105 = vector.load %arg8[%c96_49, %c0_50] : memref<128x384xf32, #tpu.memory_space<vmem>>, vector<32x384xf32>
    tpu.vector_store %arg8[%c96_49, %c0_50], %104 {strides = array<i32>} : memref<128x384xf32, #tpu.memory_space<vmem>>, vector<32x384xf32>,
    return
  }
  func.func @transform_0(%arg0: i32) -> (i32, i32) {
    %c0_i32 = arith.constant 0 : i32
    %c0_i32_0 = arith.constant 0 : i32
    return %arg0, %c0_i32 : i32, i32
  }
  func.func @transform_1(%arg0: i32) -> (i32, i32) {
    %c0_i32 = arith.constant 0 : i32
    %c0_i32_0 = arith.constant 0 : i32
    %c0_i32_1 = arith.constant 0 : i32
    return %c0_i32, %c0_i32_0 : i32, i32
  }
  func.func @transform_2(%arg0: i32) -> (i32, i32) {
    %c0_i32 = arith.constant 0 : i32
    %c0_i32_0 = arith.constant 0 : i32
    %c0_i32_1 = arith.constant 0 : i32
    return %c0_i32, %c0_i32_0 : i32, i32
  }
  func.func @transform_3(%arg0: i32) -> (i32, i32) {
    %c0_i32 = arith.constant 0 : i32
    %c0_i32_0 = arith.constant 0 : i32
    %c0_i32_1 = arith.constant 0 : i32
    return %c0_i32, %c0_i32_0 : i32, i32
  }
  func.func @transform_4(%arg0: i32) -> (i32, i32) {
    %c0_i32 = arith.constant 0 : i32
    %c0_i32_0 = arith.constant 0 : i32
    %c0_i32_1 = arith.constant 0 : i32
    return %c0_i32, %c0_i32_0 : i32, i32
  }
  func.func @transform_5(%arg0: i32) -> (i32, i32) {
    %c0_i32 = arith.constant 0 : i32
    %c0_i32_0 = arith.constant 0 : i32
    %c0_i32_1 = arith.constant 0 : i32
    return %c0_i32, %c0_i32_0 : i32, i32
  }
  func.func @transform_6(%arg0: i32) -> (i32, i32) {
    %c0_i32 = arith.constant 0 : i32
    %c0_i32_0 = arith.constant 0 : i32
    %c0_i32_1 = arith.constant 0 : i32
    return %c0_i32, %c0_i32_0 : i32, i32
  }
  func.func @transform_7(%arg0: i32) -> (i32, i32) {
    %c0_i32 = arith.constant 0 : i32
    %c0_i32_0 = arith.constant 0 : i32
    return %arg0, %c0_i32 : i32, i32
  }
}

</mosaic_0001>

<llo_original>
// kernel: tpu_custom_call.1
$region0: #{tpu_custom_call.1}
  #allocation0 [shape = 'u32[]', space=smem, size = 0x4, offset = 0x4, fixed_abs, tag = 'smem constant byte address 0x4 - core index']
  #allocation1 [shape = 'u32[72,128]{1,0:T(1,128)}', space=vmem, size = 0x9000, scoped, tag = 'internal scratch']
  %s0 = inlined_call_operand.hbm [shape: bf16[256,384], index: 0, kind: input, shape index: {}]
  %s1 = inlined_call_operand.hbm [shape: bf16[384,256], index: 1, kind: input, shape index: {}]
  %s2 = inlined_call_operand.hbm [shape: f32[1,256], index: 2, kind: input, shape index: {}]
  %s3 = inlined_call_operand.hbm [shape: bf16[256,128], index: 3, kind: input, shape index: {}]
  %s4 = inlined_call_operand.vmem [shape: f32[1,128], index: 4, kind: input, shape index: {}]
  %s5 = inlined_call_operand.hbm [shape: bf16[128,384], index: 5, kind: input, shape index: {}]
  %s6 = inlined_call_operand.vmem [shape: f32[1,384], index: 6, kind: input, shape index: {}]
  %s7 = inlined_call_operand.hbm [shape: f32[256,384], index: 7, kind: output, shape index: {}]
  %s8 = sld [smem:[#allocation0]]
  $region81: #{tpu_custom_call.1} parent=0
    _
  %s10 = ssub.s32 1, %s8
  %s11 = scalar_select 0, %s10, %s8
  $region1: #{tpu_custom_call.1} parent=0
    #allocation2 [shape = 'u8[196608]{0}', space=vmem, size = 0x30000, scoped, tag = 'input window, operand 0']
    #allocation3 [shape = 's32[2]{0}', space=sflag, size = 0x8, scoped, tag = 'scoped memory for tpu_custom_call.1']
    #allocation4 [shape = 's32[2]{0}', space=sflag, size = 0x8, scoped, tag = 'scoped memory for tpu_custom_call.1']
    #allocation5 [shape = 'u8[196608]{0}', space=vmem, size = 0x30000, scoped, tag = 'input window, operand 1, single buffered']
    #allocation6 [shape = 's32[1]{0}', space=sflag, size = 0x4, scoped, tag = 'scoped memory for tpu_custom_call.1']
    #allocation7 [shape = 'u8[1024]{0}', space=vmem, size = 0x400, scoped, tag = 'input window, operand 2, single buffered']
    #allocation8 [shape = 'u8[65536]{0}', space=vmem, size = 0x10000, scoped, tag = 'input window, operand 3, single buffered']
    #allocation9 [shape = 's32[1]{0}', space=sflag, size = 0x4, scoped, tag = 'scoped memory for tpu_custom_call.1']
    #allocation10 [shape = 'u8[98304]{0}', space=vmem, size = 0x18000, scoped, tag = 'input window, operand 5, single buffered']
    #allocation11 [shape = 'u8[393216]{0}', space=vmem, size = 0x60000, scoped, tag = 'output window, operand 0']
    %12 = vsyncpa [#allocation3], 0
    %s13 = scalar_lea.sflag [#allocation3], 1
    %14 = vsyncpa %s13, 0
    %15 = vsyncpa [#allocation6], 0
    %16 = vsyncpa [#allocation9], 0
    %17 = vsyncpa [#allocation4], 0
    %s18 = scalar_lea.sflag [#allocation4], 1
    %19 = vsyncpa %s18, 0
    loop: start=0, step=1, limit=4
    $region2: #{tpu_custom_call.1} parent=1 // loop_pre_header
      _
    $region3: #{tpu_custom_call.1} parent=1 // loop_header
      %s21 = sphi 0, %s25
      %p22 = scmp.ge.s32.totalorder %s21, 4
      %s31 = sphi 0, %s33
      %s34 = sphi 0, %s31
      %s35 = sphi 0, %s34
      %s51 = sphi 0, %s35
      %s55 = sphi 0, %s55
      %s57 = sphi 0, %s55
      %s58 = sphi 0, %s57
      %s72 = sphi 0, %s58
      %s76 = sphi 0, %s76
      %s78 = sphi 0, %s76
      %s79 = sphi 0, %s78
      %s93 = sphi 0, %s79
      %s97 = sphi 0, %s97
      %s99 = sphi 0, %s97
      %s100 = sphi 0, %s99
      %s114 = sphi 0, %s100
      %s118 = sphi 0, %s118
      %s120 = sphi 0, %s118
      %s121 = sphi 0, %s120
      %s135 = sphi 0, %s121
      %s139 = sphi 0, %s139
      %s141 = sphi 0, %s139
      %s142 = sphi 0, %s141
      %s156 = sphi 0, %s142
      %s160 = sphi 0, %s160
      %s162 = sphi 0, %s160
      %s163 = sphi 0, %s162
      %s177 = sphi 0, %s163
      %s183 = sphi 0, %s185
      %s186 = sphi 0, %s183
      %s187 = sphi 0, %s186
      %s203 = sphi 0, %s187
    $region4: #{tpu_custom_call.1} parent=1 // loop_header_branch
      %24 = sbr.rel (%p22) target = $region8
    $region5: #{tpu_custom_call.1} parent=1 // loop_body
      %s26 = ssub.s32 %s21, 1
      %s27 = ssub.s32 %s21, 2
      %s28 = sadd.s32 %s21, 1
      %s29 = ssub.s32 %s21, %s28
      %p30 = scmp.eq.s32.totalorder %s29, 0
      %s32 = sadd.s32 %s31, 1
      %s33 = scalar_select %p30, %s31, %s32
      %p36 = pneg %p30
      %p37 = scmp.eq.s32.totalorder %s21, 1
      %p38 = por %p36, %p37
      %p39 = scmp.ne.s32.totalorder %s31, %s34
      %p40 = scmp.eq.s32.totalorder %s21, 0
      %p41 = por %p39, %p40
      %p42 = scmp.ne.s32.totalorder %s31, %s34
      %p43 = scmp.eq.s32.totalorder %s26, 1
      %p44 = por %p42, %p43
      %p45 = scmp.ne.s32.totalorder %s34, %s35
      %p46 = scmp.eq.s32.totalorder %s26, 0
      %p47 = por %p45, %p46
      %p48 = scmp.ne.s32.totalorder %s34, %s35
      %p49 = scmp.eq.s32.totalorder %s27, 1
      %p50 = por %p48, %p49
      %p52 = scmp.ne.s32.totalorder %s35, %s51
      %p53 = scmp.eq.s32.totalorder %s27, 0
      %p54 = por %p52, %p53
      %s56 = sadd.s32 %s55, 1
      %p59 = scmp.eq.s32.totalorder %s21, 1
      %p60 = scmp.ne.s32.totalorder %s55, %s57
      %p61 = scmp.eq.s32.totalorder %s21, 0
      %p62 = por %p60, %p61
      %p63 = scmp.ne.s32.totalorder %s55, %s57
      %p64 = scmp.eq.s32.totalorder %s26, 1
      %p65 = por %p63, %p64
      %p66 = scmp.ne.s32.totalorder %s57, %s58
      %p67 = scmp.eq.s32.totalorder %s26, 0
      %p68 = por %p66, %p67
      %p69 = scmp.ne.s32.totalorder %s57, %s58
      %p70 = scmp.eq.s32.totalorder %s27, 1
      %p71 = por %p69, %p70
      %p73 = scmp.ne.s32.totalorder %s58, %s72
      %p74 = scmp.eq.s32.totalorder %s27, 0
      %p75 = por %p73, %p74
      %s77 = sadd.s32 %s76, 1
      %p80 = scmp.eq.s32.totalorder %s21, 1
      %p81 = scmp.ne.s32.totalorder %s76, %s78
      %p82 = scmp.eq.s32.totalorder %s21, 0
      %p83 = por %p81, %p82
      %p84 = scmp.ne.s32.totalorder %s76, %s78
      %p85 = scmp.eq.s32.totalorder %s26, 1
      %p86 = por %p84, %p85
      %p87 = scmp.ne.s32.totalorder %s78, %s79
      %p88 = scmp.eq.s32.totalorder %s26, 0
      %p89 = por %p87, %p88
      %p90 = scmp.ne.s32.totalorder %s78, %s79
      %p91 = scmp.eq.s32.totalorder %s27, 1
      %p92 = por %p90, %p91
      %p94 = scmp.ne.s32.totalorder %s79, %s93
      %p95 = scmp.eq.s32.totalorder %s27, 0
      %p96 = por %p94, %p95
      %s98 = sadd.s32 %s97, 1
      %p101 = scmp.eq.s32.totalorder %s21, 1
      %p102 = scmp.ne.s32.totalorder %s97, %s99
      %p103 = scmp.eq.s32.totalorder %s21, 0
      %p104 = por %p102, %p103
      %p105 = scmp.ne.s32.totalorder %s97, %s99
      %p106 = scmp.eq.s32.totalorder %s26, 1
      %p107 = por %p105, %p106
      %p108 = scmp.ne.s32.totalorder %s99, %s100
      %p109 = scmp.eq.s32.totalorder %s26, 0
      %p110 = por %p108, %p109
      %p111 = scmp.ne.s32.totalorder %s99, %s100
      %p112 = scmp.eq.s32.totalorder %s27, 1
      %p113 = por %p111, %p112
      %p115 = scmp.ne.s32.totalorder %s100, %s114
      %p116 = scmp.eq.s32.totalorder %s27, 0
      %p117 = por %p115, %p116
      %s119 = sadd.s32 %s118, 1
      %p122 = scmp.eq.s32.totalorder %s21, 1
      %p123 = scmp.ne.s32.totalorder %s118, %s120
      %p124 = scmp.eq.s32.totalorder %s21, 0
      %p125 = por %p123, %p124
      %p126 = scmp.ne.s32.totalorder %s118, %s120
      %p127 = scmp.eq.s32.totalorder %s26, 1
      %p128 = por %p126, %p127
      %p129 = scmp.ne.s32.totalorder %s120, %s121
      %p130 = scmp.eq.s32.totalorder %s26, 0
      %p131 = por %p129, %p130
      %p132 = scmp.ne.s32.totalorder %s120, %s121
      %p133 = scmp.eq.s32.totalorder %s27, 1
      %p134 = por %p132, %p133
      %p136 = scmp.ne.s32.totalorder %s121, %s135
      %p137 = scmp.eq.s32.totalorder %s27, 0
      %p138 = por %p136, %p137
      %s140 = sadd.s32 %s139, 1
      %p143 = scmp.eq.s32.totalorder %s21, 1
      %p144 = scmp.ne.s32.totalorder %s139, %s141
      %p145 = scmp.eq.s32.totalorder %s21, 0
      %p146 = por %p144, %p145
      %p147 = scmp.ne.s32.totalorder %s139, %s141
      %p148 = scmp.eq.s32.totalorder %s26, 1
      %p149 = por %p147, %p148
      %p150 = scmp.ne.s32.totalorder %s141, %s142
      %p151 = scmp.eq.s32.totalorder %s26, 0
      %p152 = por %p150, %p151
      %p153 = scmp.ne.s32.totalorder %s141, %s142
      %p154 = scmp.eq.s32.totalorder %s27, 1
      %p155 = por %p153, %p154
      %p157 = scmp.ne.s32.totalorder %s142, %s156
      %p158 = scmp.eq.s32.totalorder %s27, 0
      %p159 = por %p157, %p158
      %s161 = sadd.s32 %s160, 1
      %p164 = scmp.eq.s32.totalorder %s21, 1
      %p165 = scmp.ne.s32.totalorder %s160, %s162
      %p166 = scmp.eq.s32.totalorder %s21, 0
      %p167 = por %p165, %p166
      %p168 = scmp.ne.s32.totalorder %s160, %s162
      %p169 = scmp.eq.s32.totalorder %s26, 1
      %p170 = por %p168, %p169
      %p171 = scmp.ne.s32.totalorder %s162, %s163
      %p172 = scmp.eq.s32.totalorder %s26, 0
      %p173 = por %p171, %p172
      %p174 = scmp.ne.s32.totalorder %s162, %s163
      %p175 = scmp.eq.s32.totalorder %s27, 1
      %p176 = por %p174, %p175
      %p178 = scmp.ne.s32.totalorder %s163, %s177
      %p179 = scmp.eq.s32.totalorder %s27, 0
      %p180 = por %p178, %p179
      %s181 = ssub.s32 %s21, %s28
      %p182 = scmp.eq.s32.totalorder %s181, 0
      %s184 = sadd.s32 %s183, 1
      %s185 = scalar_select %p182, %s183, %s184
      %p188 = pneg %p182
      %p189 = scmp.eq.s32.totalorder %s21, 1
      %p190 = por %p188, %p189
      %p191 = scmp.ne.s32.totalorder %s183, %s186
      %p192 = scmp.eq.s32.totalorder %s21, 0
      %p193 = por %p191, %p192
      %p194 = scmp.ne.s32.totalorder %s183, %s186
      %p195 = scmp.eq.s32.totalorder %s26, 1
      %p196 = por %p194, %p195
      %p197 = scmp.ne.s32.totalorder %s186, %s187
      %p198 = scmp.eq.s32.totalorder %s26, 0
      %p199 = por %p197, %p198
      %p200 = scmp.ne.s32.totalorder %s186, %s187
      %p201 = scmp.eq.s32.totalorder %s27, 1
      %p202 = por %p200, %p201
      %p204 = scmp.ne.s32.totalorder %s187, %s203
      %p205 = scmp.eq.s32.totalorder %s27, 0
      %p206 = por %p204, %p205
      %p207 = scmp.le.s32.totalorder 1, %s21
      %p208 = scmp.lt.s32.totalorder %s21, 3
      %p209 = pnand %p207, %p208
      %p210 = pneg %p209
      // Predicated region
      $region9: #{tpu_custom_call.1} parent=5 // pred_check
        _
      $region10: #{tpu_custom_call.1} parent=5 // pred_check_branch
        %212 = sbr.rel (%p209) target = $region12
      $region11: #{tpu_custom_call.1} parent=5 // pred_region
        %s213 = ssub.s32 %s21, 1
        // Predicated region
        $region13: #{tpu_custom_call.1} parent=11 // pred_check
          %p214 = pneg %p68
        $region14: #{tpu_custom_call.1} parent=11 // pred_check_branch
          %216 = sbr.rel (%p214) target = $region16
        $region15: #{tpu_custom_call.1} parent=11 // pred_region
          %218 = vsyncadd [#allocation6], 0
          %s219 = sshll.u32 %s1, 4
          %s220 = int_to_ptr.hbm [resolvable:$true] %s219
          %s221 = sshll.u32 [#allocation5], 4
          %s222 = int_to_ptr.vmem [resolvable:$true] %s221
          %227 = dma.hbm_to_vmem [thread:$0]  %s220, 6144, %s222, [#allocation6], 128, 128, 8
        $region16: #{tpu_custom_call.1} parent=11 // pred_fallthru
          _
        // Predicated region
        $region17: #{tpu_custom_call.1} parent=11 // pred_check
          %p228 = pneg %p89
        $region18: #{tpu_custom_call.1} parent=11 // pred_check_branch
          %230 = sbr.rel (%p228) target = $region20
        $region19: #{tpu_custom_call.1} parent=11 // pred_region
          %232 = vsyncadd [#allocation6], 0
          %s234 = sshll.u32 %s2, 4
          %s235 = int_to_ptr.hbm [resolvable:$true] %s234
          %s236 = sshll.u32 [#allocation7], 4
          %s237 = int_to_ptr.vmem [resolvable:$true] %s236
          %239 = dma.hbm_to_vmem [thread:$0]  %s235, 32, %s237, [#allocation6]
        $region20: #{tpu_custom_call.1} parent=11 // pred_fallthru
          _
        // Predicated region
        $region21: #{tpu_custom_call.1} parent=11 // pred_check
          %p240 = pneg %p110
        $region22: #{tpu_custom_call.1} parent=11 // pred_check_branch
          %242 = sbr.rel (%p240) target = $region24
        $region23: #{tpu_custom_call.1} parent=11 // pred_region
          %244 = vsyncadd [#allocation9], 0
          %s245 = sshll.u32 %s3, 4
          %s246 = int_to_ptr.hbm [resolvable:$true] %s245
          %s247 = sshll.u32 [#allocation8], 4
          %s248 = int_to_ptr.vmem [resolvable:$true] %s247
          %253 = dma.hbm_to_vmem [thread:$0]  %s246, 2048, %s248, [#allocation9], 64, 64, 4
        $region24: #{tpu_custom_call.1} parent=11 // pred_fallthru
          _
        // Predicated region
        $region25: #{tpu_custom_call.1} parent=11 // pred_check
          %p254 = pneg %p131
        $region26: #{tpu_custom_call.1} parent=11 // pred_check_branch
          %256 = sbr.rel (%p254) target = $region28
        $region27: #{tpu_custom_call.1} parent=11 // pred_region
          _
        $region28: #{tpu_custom_call.1} parent=11 // pred_fallthru
          _
        // Predicated region
        $region29: #{tpu_custom_call.1} parent=11 // pred_check
          %p257 = pneg %p152
        $region30: #{tpu_custom_call.1} parent=11 // pred_check_branch
          %259 = sbr.rel (%p257) target = $region32
        $region31: #{tpu_custom_call.1} parent=11 // pred_region
          %261 = vsyncadd [#allocation9], 0
          %s262 = sshll.u32 %s5, 4
          %s263 = int_to_ptr.hbm [resolvable:$true] %s262
          %s264 = sshll.u32 [#allocation10], 4
          %s265 = int_to_ptr.vmem [resolvable:$true] %s264
          %270 = dma.hbm_to_vmem [thread:$0]  %s263, 3072, %s265, [#allocation9], 192, 192, 12
        $region32: #{tpu_custom_call.1} parent=11 // pred_fallthru
          _
        // Predicated region
        $region33: #{tpu_custom_call.1} parent=11 // pred_check
          %p271 = pneg %p173
        $region34: #{tpu_custom_call.1} parent=11 // pred_check_branch
          %273 = sbr.rel (%p271) target = $region36
        $region35: #{tpu_custom_call.1} parent=11 // pred_region
          _
        $region36: #{tpu_custom_call.1} parent=11 // pred_fallthru
          _
      $region12: #{tpu_custom_call.1} parent=5 // pred_fallthru
        _
      %p274 = scmp.lt.s32.totalorder %s21, 2
      // Predicated region
      $region37: #{tpu_custom_call.1} parent=5 // pred_check
        %p275 = pneg %p274
      $region38: #{tpu_custom_call.1} parent=5 // pred_check_branch
        %277 = sbr.rel (%p275) target = $region40
      $region39: #{tpu_custom_call.1} parent=5 // pred_region
        // Predicated region
        $region41: #{tpu_custom_call.1} parent=39 // pred_check
          %p278 = pneg %p41
        $region42: #{tpu_custom_call.1} parent=39 // pred_check_branch
          %280 = sbr.rel (%p278) target = $region44
        $region43: #{tpu_custom_call.1} parent=39 // pred_region
          %s281 = sand.u32 %s31, 1
          %s282 = scalar_lea.sflag [#allocation3], %s281
          %s283 = sand.u32 %s31, 1
          %s284 = smul.addr %s283, 192
          %s285 = scalar_lea.vmem [#allocation2], %s284
          %s286 = smul.u32 16, %s21
          %288 = vsyncadd %s282, 0
          %s289 = smul.addr %s286, 3
          %s290 = smul.addr %s289, 4
          %s291 = scalar_lea.hbm %s0, %s290
          %s292 = sshll.u32 %s291, 4
          %s293 = int_to_ptr.hbm [resolvable:$true] %s292
          %s294 = sshll.u32 %s285, 4
          %s295 = int_to_ptr.vmem [resolvable:$true] %s294
          %300 = dma.hbm_to_vmem [thread:$0]  %s293, 3072, %s295, %s282, 192, 192, 12
        $region44: #{tpu_custom_call.1} parent=39 // pred_fallthru
          _
      $region40: #{tpu_custom_call.1} parent=5 // pred_fallthru
        _
      %p301 = scmp.le.s32.totalorder 1, %s21
      %p302 = scmp.lt.s32.totalorder %s21, 3
      %p303 = pnand %p301, %p302
      %p304 = pneg %p303
      // Predicated region
      $region45: #{tpu_custom_call.1} parent=5 // pred_check
        _
      $region46: #{tpu_custom_call.1} parent=5 // pred_check_branch
        %306 = sbr.rel (%p303) target = $region48
      $region47: #{tpu_custom_call.1} parent=5 // pred_region
        %s307 = ssub.s32 %s21, 1
        %s308 = sand.u32 %s34, 1
        %s309 = scalar_lea.sflag [#allocation3], %s308
        %s310 = sand.u32 %s34, 1
        %s311 = smul.addr %s310, 192
        %s312 = scalar_lea.vmem [#allocation2], %s311
        // Predicated region
        $region49: #{tpu_custom_call.1} parent=47 // pred_check
          %p313 = pneg %p47
        $region50: #{tpu_custom_call.1} parent=47 // pred_check_branch
          %315 = sbr.rel (%p313) target = $region52
        $region51: #{tpu_custom_call.1} parent=47 // pred_region
          %317 = dma.done %s309, 3072
        $region52: #{tpu_custom_call.1} parent=47 // pred_fallthru
          _
        // Predicated region
        $region53: #{tpu_custom_call.1} parent=47 // pred_check
          %p318 = pneg %p68
        $region54: #{tpu_custom_call.1} parent=47 // pred_check_branch
          %320 = sbr.rel (%p318) target = $region56
        $region55: #{tpu_custom_call.1} parent=47 // pred_region
          %322 = dma.done [#allocation6], 6144
        $region56: #{tpu_custom_call.1} parent=47 // pred_fallthru
          _
        // Predicated region
        $region57: #{tpu_custom_call.1} parent=47 // pred_check
          %p323 = pneg %p89
        $region58: #{tpu_custom_call.1} parent=47 // pred_check_branch
          %325 = sbr.rel (%p323) target = $region60
        $region59: #{tpu_custom_call.1} parent=47 // pred_region
          %327 = dma.done [#allocation6], 32
        $region60: #{tpu_custom_call.1} parent=47 // pred_fallthru
          _
        // Predicated region
        $region61: #{tpu_custom_call.1} parent=47 // pred_check
          %p328 = pneg %p110
        $region62: #{tpu_custom_call.1} parent=47 // pred_check_branch
          %330 = sbr.rel (%p328) target = $region64
        $region63: #{tpu_custom_call.1} parent=47 // pred_region
          %332 = dma.done [#allocation9], 2048
        $region64: #{tpu_custom_call.1} parent=47 // pred_fallthru
          _
        // Predicated region
        $region65: #{tpu_custom_call.1} parent=47 // pred_check
          %p333 = pneg %p152
        $region66: #{tpu_custom_call.1} parent=47 // pred_check_branch
          %335 = sbr.rel (%p333) target = $region68
        $region67: #{tpu_custom_call.1} parent=47 // pred_region
          %337 = dma.done [#allocation9], 3072
        $region68: #{tpu_custom_call.1} parent=47 // pred_fallthru
          _
        %s338 = sand.u32 %s34, 1
        %s339 = scalar_lea.sflag [#allocation3], %s338
        %s340 = sand.u32 %s34, 1
        %s341 = smul.addr %s340, 192
        %s342 = scalar_lea.vmem [#allocation2], %s341
        %p343 = pneg %p47
        %p344 = pneg %p44
        %p345 = pneg %p68
        %p346 = pneg %p65
        %p347 = pneg %p89
        %p348 = pneg %p86
        %p349 = pneg %p110
        %p350 = pneg %p107
        %p351 = pneg %p131
        %p352 = pneg %p128
        %p353 = pneg %p152
        %p354 = pneg %p149
        %p355 = pneg %p173
        %p356 = pneg %p170
        %p357 = pneg %p199
        %p358 = pneg %p196
        %s359 = sand.u32 %s186, 1
        %s360 = scalar_lea.sflag [#allocation4], %s359
        %s361 = sand.u32 %s186, 1
        %s362 = smul.addr %s361, 384
        %s363 = scalar_lea.vmem [#allocation11], %s362
        %s364 = smul.u32 16, %s26
        %s365 = smul.u32 16, %s26
        %v366 = vld [vmem:[#allocation5] sm:$0xff]
        %v367 = vld [vmem:[#allocation5 + $0x8] sm:$0xff]
        %v368 = vld [vmem:[#allocation5 + $0x10] sm:$0xff]
        %v369 = vld [vmem:[#allocation5 + $0x18] sm:$0xff]
        %v370 = vld [vmem:[#allocation5 + $0x20] sm:$0xff]
        %v371 = vld [vmem:[#allocation5 + $0x28] sm:$0xff]
        %v372 = vld [vmem:[#allocation5 + $0x30] sm:$0xff]
        %v373 = vld [vmem:[#allocation5 + $0x38] sm:$0xff]
        %v374 = vld [vmem:[#allocation5 + $0x40] sm:$0xff]
        %v375 = vld [vmem:[#allocation5 + $0x48] sm:$0xff]
        %v376 = vld [vmem:[#allocation5 + $0x50] sm:$0xff]
        %v377 = vld [vmem:[#allocation5 + $0x58] sm:$0xff]
        %v378 = vld [vmem:[#allocation5 + $0x60] sm:$0xff]
        %v379 = vld [vmem:[#allocation5 + $0x68] sm:$0xff]
        %v380 = vld [vmem:[#allocation5 + $0x70] sm:$0xff]
        %v381 = vld [vmem:[#allocation5 + $0x78] sm:$0xff]
        %v382 = vld [vmem:[#allocation5 + $0x80] sm:$0xff]
        %v383 = vld [vmem:[#allocation5 + $0x88] sm:$0xff]
        %v384 = vld [vmem:[#allocation5 + $0x90] sm:$0xff]
        %v385 = vld [vmem:[#allocation5 + $0x98] sm:$0xff]
        %v386 = vld [vmem:[#allocation5 + $0xa0] sm:$0xff]
        %v387 = vld [vmem:[#allocation5 + $0xa8] sm:$0xff]
        %v388 = vld [vmem:[#allocation5 + $0xb0] sm:$0xff]
        %v389 = vld [vmem:[#allocation5 + $0xb8] sm:$0xff]
        %v390 = vld [vmem:[#allocation5 + $0xc0] sm:$0xff]
        %v391 = vld [vmem:[#allocation5 + $0xc8] sm:$0xff]
        %v392 = vld [vmem:[#allocation5 + $0xd0] sm:$0xff]
        %v393 = vld [vmem:[#allocation5 + $0xd8] sm:$0xff]
        %v394 = vld [vmem:[#allocation5 + $0xe0] sm:$0xff]
        %v395 = vld [vmem:[#allocation5 + $0xe8] sm:$0xff]
        %v396 = vld [vmem:[#allocation5 + $0xf0] sm:$0xff]
        %v397 = vld [vmem:[#allocation5 + $0xf8] sm:$0xff]
        %v398 = vld [vmem:[#allocation5 + $0x100] sm:$0xff]
        %v399 = vld [vmem:[#allocation5 + $0x108] sm:$0xff]
        %v400 = vld [vmem:[#allocation5 + $0x110] sm:$0xff]
        %v401 = vld [vmem:[#allocation5 + $0x118] sm:$0xff]
        %v402 = vld [vmem:[#allocation5 + $0x120] sm:$0xff]
        %v403 = vld [vmem:[#allocation5 + $0x128] sm:$0xff]
        %v404 = vld [vmem:[#allocation5 + $0x130] sm:$0xff]
        %v405 = vld [vmem:[#allocation5 + $0x138] sm:$0xff]
        %v406 = vld [vmem:[#allocation5 + $0x140] sm:$0xff]
        %v407 = vld [vmem:[#allocation5 + $0x148] sm:$0xff]
        %v408 = vld [vmem:[#allocation5 + $0x150] sm:$0xff]
        %v409 = vld [vmem:[#allocation5 + $0x158] sm:$0xff]
        %v410 = vld [vmem:[#allocation5 + $0x160] sm:$0xff]
        %v411 = vld [vmem:[#allocation5 + $0x168] sm:$0xff]
        %v412 = vld [vmem:[#allocation5 + $0x170] sm:$0xff]
        %v413 = vld [vmem:[#allocation5 + $0x178] sm:$0xff]
        %v414 = vld [vmem:[#allocation8] sm:$0xf]
        %v415 = vld [vmem:[#allocation8 + $0x4] sm:$0xf]
        %v416 = vld [vmem:[#allocation8 + $0x8] sm:$0xf]
        %v417 = vld [vmem:[#allocation8 + $0xc] sm:$0xf]
        %v418 = vld [vmem:[#allocation8 + $0x10] sm:$0xf]
        %v419 = vld [vmem:[#allocation8 + $0x14] sm:$0xf]
        %v420 = vld [vmem:[#allocation8 + $0x18] sm:$0xf]
        %v421 = vld [vmem:[#allocation8 + $0x1c] sm:$0xf]
        %v422 = vld [vmem:[#allocation8 + $0x20] sm:$0xf]
        %v423 = vld [vmem:[#allocation8 + $0x24] sm:$0xf]
        %v424 = vld [vmem:[#allocation8 + $0x28] sm:$0xf]
        %v425 = vld [vmem:[#allocation8 + $0x2c] sm:$0xf]
        %v426 = vld [vmem:[#allocation8 + $0x30] sm:$0xf]
        %v427 = vld [vmem:[#allocation8 + $0x34] sm:$0xf]
        %v428 = vld [vmem:[#allocation8 + $0x38] sm:$0xf]
        %v429 = vld [vmem:[#allocation8 + $0x3c] sm:$0xf]
        %v430 = vld [vmem:[#allocation8 + $0x40] sm:$0xf]
        %v431 = vld [vmem:[#allocation8 + $0x44] sm:$0xf]
        %v432 = vld [vmem:[#allocation8 + $0x48] sm:$0xf]
        %v433 = vld [vmem:[#allocation8 + $0x4c] sm:$0xf]
        %v434 = vld [vmem:[#allocation8 + $0x50] sm:$0xf]
        %v435 = vld [vmem:[#allocation8 + $0x54] sm:$0xf]
        %v436 = vld [vmem:[#allocation8 + $0x58] sm:$0xf]
        %v437 = vld [vmem:[#allocation8 + $0x5c] sm:$0xf]
        %v438 = vld [vmem:[#allocation8 + $0x60] sm:$0xf]
        %v439 = vld [vmem:[#allocation8 + $0x64] sm:$0xf]
        %v440 = vld [vmem:[#allocation8 + $0x68] sm:$0xf]
        %v441 = vld [vmem:[#allocation8 + $0x6c] sm:$0xf]
        %v442 = vld [vmem:[#allocation8 + $0x70] sm:$0xf]
        %v443 = vld [vmem:[#allocation8 + $0x74] sm:$0xf]
        %v444 = vld [vmem:[#allocation8 + $0x78] sm:$0xf]
        %v445 = vld [vmem:[#allocation8 + $0x7c] sm:$0xf]
        %v446 = vld [vmem:[#allocation10] sm:$0xff]
        %v447 = vld [vmem:[#allocation10 + $0x8] sm:$0xf]
        %v448 = vld [vmem:[#allocation10 + $0xc] sm:$0xff]
        %v449 = vld [vmem:[#allocation10 + $0x14] sm:$0xf]
        %v450 = vld [vmem:[#allocation10 + $0x18] sm:$0xff]
        %v451 = vld [vmem:[#allocation10 + $0x20] sm:$0xf]
        %v452 = vld [vmem:[#allocation10 + $0x24] sm:$0xff]
        %v453 = vld [vmem:[#allocation10 + $0x2c] sm:$0xf]
        %v454 = vld [vmem:[#allocation10 + $0x30] sm:$0xff]
        %v455 = vld [vmem:[#allocation10 + $0x38] sm:$0xf]
        %v456 = vld [vmem:[#allocation10 + $0x3c] sm:$0xff]
        %v457 = vld [vmem:[#allocation10 + $0x44] sm:$0xf]
        %v458 = vld [vmem:[#allocation10 + $0x48] sm:$0xff]
        %v459 = vld [vmem:[#allocation10 + $0x50] sm:$0xf]
        %v460 = vld [vmem:[#allocation10 + $0x54] sm:$0xff]
        %v461 = vld [vmem:[#allocation10 + $0x5c] sm:$0xf]
        %v462 = vld [vmem:[#allocation10 + $0x60] sm:$0xff]
        %v463 = vld [vmem:[#allocation10 + $0x68] sm:$0xf]
        %v464 = vld [vmem:[#allocation10 + $0x6c] sm:$0xff]
        %v465 = vld [vmem:[#allocation10 + $0x74] sm:$0xf]
        %v466 = vld [vmem:[#allocation10 + $0x78] sm:$0xff]
        %v467 = vld [vmem:[#allocation10 + $0x80] sm:$0xf]
        %v468 = vld [vmem:[#allocation10 + $0x84] sm:$0xff]
        %v469 = vld [vmem:[#allocation10 + $0x8c] sm:$0xf]
        %v470 = vld [vmem:[#allocation10 + $0x90] sm:$0xff]
        %v471 = vld [vmem:[#allocation10 + $0x98] sm:$0xf]
        %v472 = vld [vmem:[#allocation10 + $0x9c] sm:$0xff]
        %v473 = vld [vmem:[#allocation10 + $0xa4] sm:$0xf]
        %v474 = vld [vmem:[#allocation10 + $0xa8] sm:$0xff]
        %v475 = vld [vmem:[#allocation10 + $0xb0] sm:$0xf]
        %v476 = vld [vmem:[#allocation10 + $0xb4] sm:$0xff]
        %v477 = vld [vmem:[#allocation10 + $0xbc] sm:$0xf]
        %v478 = vld [vmem:[#allocation7] sm:$0x3]
        %v479 = vld [vmem:[%s4] sm:$0x1]
        %v480 = vld [vmem:[%s6] sm:$0x7]
        %v481 = vld [vmem:[%s312] sm:$0xff]
        %v482 = vld [vmem:[%s312 + $0x8] sm:$0xf]
        %v483 = vld [vmem:[%s312 + $0xc] sm:$0xff]
        %v484 = vld [vmem:[%s312 + $0x14] sm:$0xf]
        %v485 = vld [vmem:[%s312 + $0x18] sm:$0xff]
        %v486 = vld [vmem:[%s312 + $0x20] sm:$0xf]
        %v487 = vld [vmem:[%s312 + $0x24] sm:$0xff]
        %v488 = vld [vmem:[%s312 + $0x2c] sm:$0xf]
        %v490 = vperm.slane %v478, 0
        %v491 = vperm.slane %v478, 1
        %v502 = vunpack.c.l.b16 %v481
        %v503 = vunpack.c.h.b16 %v481
        %v504 = vunpack.c.l.b16 %v482
        %v505 = vunpack.c.l.b16 %v483
        %v506 = vunpack.c.h.b16 %v483
        %v507 = vunpack.c.l.b16 %v484
        %v508 = vunpack.c.l.b16 %v485
        %v509 = vunpack.c.h.b16 %v485
        %v510 = vunpack.c.l.b16 %v486
        %v511 = vunpack.c.l.b16 %v487
        %v512 = vunpack.c.h.b16 %v487
        %v513 = vunpack.c.l.b16 %v488
        %v514 = vpack.c.b16 %v505, %v502
        %v515 = vpack.c.b16 %v506, %v503
        %v516 = vpack.c.b16 %v507, %v504
        %v517 = vpack.c.b16 %v511, %v508
        %v518 = vpack.c.b16 %v512, %v509
        %v519 = vpack.c.b16 %v513, %v510
        %v574 = vunpack.c.l.b16 %v366
        %v575 = vunpack.c.h.b16 %v366
        %v576 = vunpack.c.l.b16 %v367
        %v577 = vunpack.c.h.b16 %v367
        %v578 = vunpack.c.l.b16 %v368
        %v579 = vunpack.c.h.b16 %v368
        %v580 = vunpack.c.l.b16 %v369
        %v581 = vunpack.c.h.b16 %v369
        %v582 = vunpack.c.l.b16 %v370
        %v583 = vunpack.c.h.b16 %v370
        %v584 = vunpack.c.l.b16 %v371
        %v585 = vunpack.c.h.b16 %v371
        %v586 = vunpack.c.l.b16 %v372
        %v587 = vunpack.c.h.b16 %v372
        %v588 = vunpack.c.l.b16 %v373
        %v589 = vunpack.c.h.b16 %v373
        %v590 = vunpack.c.l.b16 %v374
        %v591 = vunpack.c.h.b16 %v374
        %v592 = vunpack.c.l.b16 %v375
        %v593 = vunpack.c.h.b16 %v375
        %v594 = vunpack.c.l.b16 %v376
        %v595 = vunpack.c.h.b16 %v376
        %v596 = vunpack.c.l.b16 %v377
        %v597 = vunpack.c.h.b16 %v377
        %v598 = vunpack.c.l.b16 %v378
        %v599 = vunpack.c.h.b16 %v378
        %v600 = vunpack.c.l.b16 %v379
        %v601 = vunpack.c.h.b16 %v379
        %v602 = vunpack.c.l.b16 %v380
        %v603 = vunpack.c.h.b16 %v380
        %v604 = vunpack.c.l.b16 %v381
        %v605 = vunpack.c.h.b16 %v381
        %v606 = vunpack.c.l.b16 %v382
        %v607 = vunpack.c.h.b16 %v382
        %v608 = vunpack.c.l.b16 %v383
        %v609 = vunpack.c.h.b16 %v383
        %v610 = vunpack.c.l.b16 %v384
        %v611 = vunpack.c.h.b16 %v384
        %v612 = vunpack.c.l.b16 %v385
        %v613 = vunpack.c.h.b16 %v385
        %v614 = vunpack.c.l.b16 %v386
        %v615 = vunpack.c.h.b16 %v386
        %v616 = vunpack.c.l.b16 %v387
        %v617 = vunpack.c.h.b16 %v387
        %v618 = vunpack.c.l.b16 %v388
        %v619 = vunpack.c.h.b16 %v388
        %v620 = vunpack.c.l.b16 %v389
        %v621 = vunpack.c.h.b16 %v389
        %v622 = vunpack.c.l.b16 %v390
        %v623 = vunpack.c.h.b16 %v390
        %v624 = vunpack.c.l.b16 %v391
        %v625 = vunpack.c.h.b16 %v391
        %v626 = vunpack.c.l.b16 %v392
        %v627 = vunpack.c.h.b16 %v392
        %v628 = vunpack.c.l.b16 %v393
        %v629 = vunpack.c.h.b16 %v393
        %v630 = vunpack.c.l.b16 %v394
        %v631 = vunpack.c.h.b16 %v394
        %v632 = vunpack.c.l.b16 %v395
        %v633 = vunpack.c.h.b16 %v395
        %v634 = vunpack.c.l.b16 %v396
        %v635 = vunpack.c.h.b16 %v396
        %v636 = vunpack.c.l.b16 %v397
        %v637 = vunpack.c.h.b16 %v397
        %v638 = vunpack.c.l.b16 %v398
        %v639 = vunpack.c.h.b16 %v398
        %v640 = vunpack.c.l.b16 %v399
        %v641 = vunpack.c.h.b16 %v399
        %v642 = vunpack.c.l.b16 %v400
        %v643 = vunpack.c.h.b16 %v400
        %v644 = vunpack.c.l.b16 %v401
        %v645 = vunpack.c.h.b16 %v401
        %v646 = vunpack.c.l.b16 %v402
        %v647 = vunpack.c.h.b16 %v402
        %v648 = vunpack.c.l.b16 %v403
        %v649 = vunpack.c.h.b16 %v403
        %v650 = vunpack.c.l.b16 %v404
        %v651 = vunpack.c.h.b16 %v404
        %v652 = vunpack.c.l.b16 %v405
        %v653 = vunpack.c.h.b16 %v405
        %v654 = vunpack.c.l.b16 %v406
        %v655 = vunpack.c.h.b16 %v406
        %v656 = vunpack.c.l.b16 %v407
        %v657 = vunpack.c.h.b16 %v407
        %v658 = vunpack.c.l.b16 %v408
        %v659 = vunpack.c.h.b16 %v408
        %v660 = vunpack.c.l.b16 %v409
        %v661 = vunpack.c.h.b16 %v409
        %v662 = vunpack.c.l.b16 %v410
        %v663 = vunpack.c.h.b16 %v410
        %v664 = vunpack.c.l.b16 %v411
        %v665 = vunpack.c.h.b16 %v411
        %v666 = vunpack.c.l.b16 %v412
        %v667 = vunpack.c.h.b16 %v412
        %v668 = vunpack.c.l.b16 %v413
        %v669 = vunpack.c.h.b16 %v413
        %v670 = vpack.c.b16 %v576, %v574
        %v671 = vpack.c.b16 %v577, %v575
        %v672 = vpack.c.b16 %v580, %v578
        %v673 = vpack.c.b16 %v581, %v579
        %v674 = vpack.c.b16 %v584, %v582
        %v675 = vpack.c.b16 %v585, %v583
        %v676 = vpack.c.b16 %v588, %v586
        %v677 = vpack.c.b16 %v589, %v587
        %v678 = vpack.c.b16 %v592, %v590
        %v679 = vpack.c.b16 %v593, %v591
        %v680 = vpack.c.b16 %v596, %v594
        %v681 = vpack.c.b16 %v597, %v595
        %v682 = vpack.c.b16 %v600, %v598
        %v683 = vpack.c.b16 %v601, %v599
        %v684 = vpack.c.b16 %v604, %v602
        %v685 = vpack.c.b16 %v605, %v603
        %v686 = vpack.c.b16 %v608, %v606
        %v687 = vpack.c.b16 %v609, %v607
        %v688 = vpack.c.b16 %v612, %v610
        %v689 = vpack.c.b16 %v613, %v611
        %v690 = vpack.c.b16 %v616, %v614
        %v691 = vpack.c.b16 %v617, %v615
        %v692 = vpack.c.b16 %v620, %v618
        %v693 = vpack.c.b16 %v621, %v619
        %v694 = vpack.c.b16 %v624, %v622
        %v695 = vpack.c.b16 %v625, %v623
        %v696 = vpack.c.b16 %v628, %v626
        %v697 = vpack.c.b16 %v629, %v627
        %v698 = vpack.c.b16 %v632, %v630
        %v699 = vpack.c.b16 %v633, %v631
        %v700 = vpack.c.b16 %v636, %v634
        %v701 = vpack.c.b16 %v637, %v635
        %v702 = vpack.c.b16 %v640, %v638
        %v703 = vpack.c.b16 %v641, %v639
        %v704 = vpack.c.b16 %v644, %v642
        %v705 = vpack.c.b16 %v645, %v643
        %v706 = vpack.c.b16 %v648, %v646
        %v707 = vpack.c.b16 %v649, %v647
        %v708 = vpack.c.b16 %v652, %v650
        %v709 = vpack.c.b16 %v653, %v651
        %v710 = vpack.c.b16 %v656, %v654
        %v711 = vpack.c.b16 %v657, %v655
        %v712 = vpack.c.b16 %v660, %v658
        %v713 = vpack.c.b16 %v661, %v659
        %v714 = vpack.c.b16 %v664, %v662
        %v715 = vpack.c.b16 %v665, %v663
        %v716 = vpack.c.b16 %v668, %v666
        %v717 = vpack.c.b16 %v669, %v667
        %766 = vmatpush.bf16.msra.mxu0 %v684
        %767 = vmatpush.bf16.msra.mxu0 %v682
        %768 = vmatpush.bf16.msra.mxu0 %v680
        %769 = vmatpush.bf16.msra.mxu0 %v678
        %770 = vmatpush.bf16.msra.mxu0 %v676
        %771 = vmatpush.bf16.msra.mxu0 %v674
        %772 = vmatpush.bf16.msra.mxu0 %v672
        %773 = vmatpush.bf16.msra.mxu0 %v670
        %774 = vmatmul.bf16.gmra.mxu0 %v514
        %v775 = vpop.f32.mrf.mxu0
        %v776 = vadd.f32 %v490, %v775
        %v777 = vpop.f32.mrf.mxu0
        %v778 = vadd.f32 %v490, %v777
        %779 = vmatmul.bf16.gmra.mxu0 %v517
        %v780 = vpop.f32.mrf.mxu0
        %v781 = vadd.f32 %v490, %v780
        %v782 = vpop.f32.mrf.mxu0
        %v783 = vadd.f32 %v490, %v782
        %784 = vdwg.mxu0
        %785 = vmatpush.bf16.msra.mxu0 %v700
        %786 = vmatpush.bf16.msra.mxu0 %v698
        %787 = vmatpush.bf16.msra.mxu0 %v696
        %788 = vmatpush.bf16.msra.mxu0 %v694
        %789 = vmatpush.bf16.msra.mxu0 %v692
        %790 = vmatpush.bf16.msra.mxu0 %v690
        %791 = vmatpush.bf16.msra.mxu0 %v688
        %792 = vmatpush.bf16.msra.mxu0 %v686
        %793 = vmatmul.bf16.gmra.mxu0 %v515
        %v794 = vpop.f32.mrf.mxu0
        %v795 = vadd.f32 %v776, %v794
        %v796 = vpop.f32.mrf.mxu0
        %v797 = vadd.f32 %v778, %v796
        %798 = vmatmul.bf16.gmra.mxu0 %v518
        %v799 = vpop.f32.mrf.mxu0
        %v800 = vadd.f32 %v781, %v799
        %v801 = vpop.f32.mrf.mxu0
        %v802 = vadd.f32 %v783, %v801
        %803 = vdwg.mxu0
        %804 = vmatpush.bf16.msra.mxu0 %v716
        %805 = vmatpush.bf16.msra.mxu0 %v714
        %806 = vmatpush.bf16.msra.mxu0 %v712
        %807 = vmatpush.bf16.msra.mxu0 %v710
        %808 = vmatpush.bf16.msra.mxu0 %v708
        %809 = vmatpush.bf16.msra.mxu0 %v706
        %810 = vmatpush.bf16.msra.mxu0 %v704
        %811 = vmatpush.bf16.msra.mxu0 %v702
        %812 = vmatmul.bf16.gmra.mxu0 %v516
        %v813 = vpop.f32.mrf.mxu0
        %v814 = vadd.f32 %v795, %v813
        %v815 = vpop.f32.mrf.mxu0
        %v816 = vadd.f32 %v797, %v815
        %817 = vmatmul.bf16.gmra.mxu0 %v519
        %v818 = vpop.f32.mrf.mxu0
        %v819 = vadd.f32 %v800, %v818
        %v820 = vpop.f32.mrf.mxu0
        %v821 = vadd.f32 %v802, %v820
        %822 = vdwg.mxu0
        %823 = vmatpush.bf16.msra.mxu0 %v685
        %824 = vmatpush.bf16.msra.mxu0 %v683
        %825 = vmatpush.bf16.msra.mxu0 %v681
        %826 = vmatpush.bf16.msra.mxu0 %v679
        %827 = vmatpush.bf16.msra.mxu0 %v677
        %828 = vmatpush.bf16.msra.mxu0 %v675
        %829 = vmatpush.bf16.msra.mxu0 %v673
        %830 = vmatpush.bf16.msra.mxu0 %v671
        %831 = vmatmul.bf16.gmra.mxu0 %v514
        %v832 = vpop.f32.mrf.mxu0
        %v833 = vadd.f32 %v491, %v832
        %v834 = vpop.f32.mrf.mxu0
        %v835 = vadd.f32 %v491, %v834
        %836 = vmatmul.bf16.gmra.mxu0 %v517
        %v837 = vpop.f32.mrf.mxu0
        %v838 = vadd.f32 %v491, %v837
        %v839 = vpop.f32.mrf.mxu0
        %v840 = vadd.f32 %v491, %v839
        %841 = vdwg.mxu0
        %842 = vmatpush.bf16.msra.mxu0 %v701
        %843 = vmatpush.bf16.msra.mxu0 %v699
        %844 = vmatpush.bf16.msra.mxu0 %v697
        %845 = vmatpush.bf16.msra.mxu0 %v695
        %846 = vmatpush.bf16.msra.mxu0 %v693
        %847 = vmatpush.bf16.msra.mxu0 %v691
        %848 = vmatpush.bf16.msra.mxu0 %v689
        %849 = vmatpush.bf16.msra.mxu0 %v687
        %850 = vmatmul.bf16.gmra.mxu0 %v515
        %v851 = vpop.f32.mrf.mxu0
        %v852 = vadd.f32 %v833, %v851
        %v853 = vpop.f32.mrf.mxu0
        %v854 = vadd.f32 %v835, %v853
        %855 = vmatmul.bf16.gmra.mxu0 %v518
        %v856 = vpop.f32.mrf.mxu0
        %v857 = vadd.f32 %v838, %v856
        %v858 = vpop.f32.mrf.mxu0
        %v859 = vadd.f32 %v840, %v858
        %860 = vdwg.mxu0
        %861 = vmatpush.bf16.msra.mxu0 %v717
        %862 = vmatpush.bf16.msra.mxu0 %v715
        %863 = vmatpush.bf16.msra.mxu0 %v713
        %864 = vmatpush.bf16.msra.mxu0 %v711
        %865 = vmatpush.bf16.msra.mxu0 %v709
        %866 = vmatpush.bf16.msra.mxu0 %v707
        %867 = vmatpush.bf16.msra.mxu0 %v705
        %868 = vmatpush.bf16.msra.mxu0 %v703
        %869 = vmatmul.bf16.gmra.mxu0 %v516
        %v870 = vpop.f32.mrf.mxu0
        %v871 = vadd.f32 %v852, %v870
        %v872 = vpop.f32.mrf.mxu0
        %v873 = vadd.f32 %v854, %v872
        %874 = vmatmul.bf16.gmra.mxu0 %v519
        %v875 = vpop.f32.mrf.mxu0
        %v876 = vadd.f32 %v857, %v875
        %v877 = vpop.f32.mrf.mxu0
        %v878 = vadd.f32 %v859, %v877
        %879 = vdwg.mxu0
        %vm880 = vcmp.gt.f32.partialorder %v814, 0.0
        %vm881 = vcmp.gt.f32.partialorder %v871, 0.0
        %vm882 = vcmp.gt.f32.partialorder %v816, 0.0
        %vm883 = vcmp.gt.f32.partialorder %v873, 0.0
        %vm884 = vcmp.gt.f32.partialorder %v819, 0.0
        %vm885 = vcmp.gt.f32.partialorder %v876, 0.0
        %vm886 = vcmp.gt.f32.partialorder %v821, 0.0
        %vm887 = vcmp.gt.f32.partialorder %v878, 0.0
        %v888 = vmul.f32 %v814, 1.442695
        %v889 = vpow.pop %v888
        %v890 = vmul.f32 %v871, 1.442695
        %v891 = vpow.pop %v890
        %v892 = vmul.f32 %v816, 1.442695
        %v893 = vpow.pop %v892
        %v894 = vmul.f32 %v873, 1.442695
        %v895 = vpow.pop %v894
        %v896 = vmul.f32 %v819, 1.442695
        %v897 = vpow.pop %v896
        %v898 = vmul.f32 %v876, 1.442695
        %v899 = vpow.pop %v898
        %v900 = vmul.f32 %v821, 1.442695
        %v901 = vpow.pop %v900
        %v902 = vmul.f32 %v878, 1.442695
        %v903 = vpow.pop %v902
        %v904 = vsub.f32 %v889, 1.0
        %v905 = vsub.f32 %v891, 1.0
        %v906 = vsub.f32 %v893, 1.0
        %v907 = vsub.f32 %v895, 1.0
        %v908 = vsub.f32 %v897, 1.0
        %v909 = vsub.f32 %v899, 1.0
        %v910 = vsub.f32 %v901, 1.0
        %v911 = vsub.f32 %v903, 1.0
        %v912 = vsel %vm880, %v814, %v904
        %v913 = vsel %vm881, %v871, %v905
        %v914 = vsel %vm882, %v816, %v906
        %v915 = vsel %vm883, %v873, %v907
        %v916 = vsel %vm884, %v819, %v908
        %v917 = vsel %vm885, %v876, %v909
        %v918 = vsel %vm886, %v821, %v910
        %v919 = vsel %vm887, %v878, %v911
        %v920 = vpack.c.bf16 %v914, %v912
        %v921 = vpack.c.bf16 %v915, %v913
        %v922 = vpack.c.bf16 %v918, %v916
        %v923 = vpack.c.bf16 %v919, %v917
        %v925 = vperm.slane %v479, 0
        %v959 = vunpack.c.l.b16 %v414
        %v960 = vunpack.c.l.b16 %v415
        %v961 = vunpack.c.l.b16 %v416
        %v962 = vunpack.c.l.b16 %v417
        %v963 = vunpack.c.l.b16 %v418
        %v964 = vunpack.c.l.b16 %v419
        %v965 = vunpack.c.l.b16 %v420
        %v966 = vunpack.c.l.b16 %v421
        %v967 = vunpack.c.l.b16 %v422
        %v968 = vunpack.c.l.b16 %v423
        %v969 = vunpack.c.l.b16 %v424
        %v970 = vunpack.c.l.b16 %v425
        %v971 = vunpack.c.l.b16 %v426
        %v972 = vunpack.c.l.b16 %v427
        %v973 = vunpack.c.l.b16 %v428
        %v974 = vunpack.c.l.b16 %v429
        %v975 = vunpack.c.l.b16 %v430
        %v976 = vunpack.c.l.b16 %v431
        %v977 = vunpack.c.l.b16 %v432
        %v978 = vunpack.c.l.b16 %v433
        %v979 = vunpack.c.l.b16 %v434
        %v980 = vunpack.c.l.b16 %v435
        %v981 = vunpack.c.l.b16 %v436
        %v982 = vunpack.c.l.b16 %v437
        %v983 = vunpack.c.l.b16 %v438
        %v984 = vunpack.c.l.b16 %v439
        %v985 = vunpack.c.l.b16 %v440
        %v986 = vunpack.c.l.b16 %v441
        %v987 = vunpack.c.l.b16 %v442
        %v988 = vunpack.c.l.b16 %v443
        %v989 = vunpack.c.l.b16 %v444
        %v990 = vunpack.c.l.b16 %v445
        %v991 = vpack.c.b16 %v960, %v959
        %v992 = vpack.c.b16 %v962, %v961
        %v993 = vpack.c.b16 %v964, %v963
        %v994 = vpack.c.b16 %v966, %v965
        %v995 = vpack.c.b16 %v968, %v967
        %v996 = vpack.c.b16 %v970, %v969
        %v997 = vpack.c.b16 %v972, %v971
        %v998 = vpack.c.b16 %v974, %v973
        %v999 = vpack.c.b16 %v976, %v975
        %v1000 = vpack.c.b16 %v978, %v977
        %v1001 = vpack.c.b16 %v980, %v979
        %v1002 = vpack.c.b16 %v982, %v981
        %v1003 = vpack.c.b16 %v984, %v983
        %v1004 = vpack.c.b16 %v986, %v985
        %v1005 = vpack.c.b16 %v988, %v987
        %v1006 = vpack.c.b16 %v990, %v989
        %1023 = vmatpush.bf16.msra.mxu0 %v998
        %1024 = vmatpush.bf16.msra.mxu0 %v997
        %1025 = vmatpush.bf16.msra.mxu0 %v996
        %1026 = vmatpush.bf16.msra.mxu0 %v995
        %1027 = vmatpush.bf16.msra.mxu0 %v994
        %1028 = vmatpush.bf16.msra.mxu0 %v993
        %1029 = vmatpush.bf16.msra.mxu0 %v992
        %1030 = vmatpush.bf16.msra.mxu0 %v991
        %1031 = vmatmul.bf16.gmra.mxu0 %v920
        %v1032 = vpop.f32.mrf.mxu0
        %v1033 = vadd.f32 %v925, %v1032
        %v1034 = vpop.f32.mrf.mxu0
        %v1035 = vadd.f32 %v925, %v1034
        %1036 = vmatmul.bf16.gmra.mxu0 %v922
        %v1037 = vpop.f32.mrf.mxu0
        %v1038 = vadd.f32 %v925, %v1037
        %v1039 = vpop.f32.mrf.mxu0
        %v1040 = vadd.f32 %v925, %v1039
        %1041 = vdwg.mxu0
        %1042 = vmatpush.bf16.msra.mxu0 %v1006
        %1043 = vmatpush.bf16.msra.mxu0 %v1005
        %1044 = vmatpush.bf16.msra.mxu0 %v1004
        %1045 = vmatpush.bf16.msra.mxu0 %v1003
        %1046 = vmatpush.bf16.msra.mxu0 %v1002
        %1047 = vmatpush.bf16.msra.mxu0 %v1001
        %1048 = vmatpush.bf16.msra.mxu0 %v1000
        %1049 = vmatpush.bf16.msra.mxu0 %v999
        %1050 = vmatmul.bf16.gmra.mxu0 %v921
        %v1051 = vpop.f32.mrf.mxu0
        %v1052 = vadd.f32 %v1033, %v1051
        %v1053 = vpop.f32.mrf.mxu0
        %v1054 = vadd.f32 %v1035, %v1053
        %1055 = vmatmul.bf16.gmra.mxu0 %v923
        %v1056 = vpop.f32.mrf.mxu0
        %v1057 = vadd.f32 %v1038, %v1056
        %v1058 = vpop.f32.mrf.mxu0
        %v1059 = vadd.f32 %v1040, %v1058
        %1060 = vdwg.mxu0
        %vm1061 = vcmp.gt.f32.partialorder %v1052, 0.0
        %vm1062 = vcmp.gt.f32.partialorder %v1054, 0.0
        %vm1063 = vcmp.gt.f32.partialorder %v1057, 0.0
        %vm1064 = vcmp.gt.f32.partialorder %v1059, 0.0
        %v1065 = vmul.f32 %v1052, 1.442695
        %v1066 = vpow.pop %v1065
        %v1067 = vmul.f32 %v1054, 1.442695
        %v1068 = vpow.pop %v1067
        %v1069 = vmul.f32 %v1057, 1.442695
        %v1070 = vpow.pop %v1069
        %v1071 = vmul.f32 %v1059, 1.442695
        %v1072 = vpow.pop %v1071
        %v1073 = vsub.f32 %v1066, 1.0
        %v1074 = vsub.f32 %v1068, 1.0
        %v1075 = vsub.f32 %v1070, 1.0
        %v1076 = vsub.f32 %v1072, 1.0
        %v1077 = vsel %vm1061, %v1052, %v1073
        %v1078 = vsel %vm1062, %v1054, %v1074
        %v1079 = vsel %vm1063, %v1057, %v1075
        %v1080 = vsel %vm1064, %v1059, %v1076
        %v1081 = vpack.c.bf16 %v1078, %v1077
        %v1082 = vpack.c.bf16 %v1080, %v1079
        %v1084 = vperm.slane %v480, 0
        %v1085 = vperm.slane %v480, 1
        %v1086 = vperm.slane %v480, 2
        %v1122 = vunpack.c.l.b16 %v446
        %v1123 = vunpack.c.h.b16 %v446
        %v1124 = vunpack.c.l.b16 %v447
        %v1125 = vunpack.c.l.b16 %v448
        %v1126 = vunpack.c.h.b16 %v448
        %v1127 = vunpack.c.l.b16 %v449
        %v1128 = vunpack.c.l.b16 %v450
        %v1129 = vunpack.c.h.b16 %v450
        %v1130 = vunpack.c.l.b16 %v451
        %v1131 = vunpack.c.l.b16 %v452
        %v1132 = vunpack.c.h.b16 %v452
        %v1133 = vunpack.c.l.b16 %v453
        %v1134 = vunpack.c.l.b16 %v454
        %v1135 = vunpack.c.h.b16 %v454
        %v1136 = vunpack.c.l.b16 %v455
        %v1137 = vunpack.c.l.b16 %v456
        %v1138 = vunpack.c.h.b16 %v456
        %v1139 = vunpack.c.l.b16 %v457
        %v1140 = vunpack.c.l.b16 %v458
        %v1141 = vunpack.c.h.b16 %v458
        %v1142 = vunpack.c.l.b16 %v459
        %v1143 = vunpack.c.l.b16 %v460
        %v1144 = vunpack.c.h.b16 %v460
        %v1145 = vunpack.c.l.b16 %v461
        %v1146 = vunpack.c.l.b16 %v462
        %v1147 = vunpack.c.h.b16 %v462
        %v1148 = vunpack.c.l.b16 %v463
        %v1149 = vunpack.c.l.b16 %v464
        %v1150 = vunpack.c.h.b16 %v464
        %v1151 = vunpack.c.l.b16 %v465
        %v1152 = vunpack.c.l.b16 %v466
        %v1153 = vunpack.c.h.b16 %v466
        %v1154 = vunpack.c.l.b16 %v467
        %v1155 = vunpack.c.l.b16 %v468
        %v1156 = vunpack.c.h.b16 %v468
        %v1157 = vunpack.c.l.b16 %v469
        %v1158 = vunpack.c.l.b16 %v470
        %v1159 = vunpack.c.h.b16 %v470
        %v1160 = vunpack.c.l.b16 %v471
        %v1161 = vunpack.c.l.b16 %v472
        %v1162 = vunpack.c.h.b16 %v472
        %v1163 = vunpack.c.l.b16 %v473
        %v1164 = vunpack.c.l.b16 %v474
        %v1165 = vunpack.c.h.b16 %v474
        %v1166 = vunpack.c.l.b16 %v475
        %v1167 = vunpack.c.l.b16 %v476
        %v1168 = vunpack.c.h.b16 %v476
        %v1169 = vunpack.c.l.b16 %v477
        %v1170 = vpack.c.b16 %v1125, %v1122
        %v1171 = vpack.c.b16 %v1126, %v1123
        %v1172 = vpack.c.b16 %v1127, %v1124
        %v1173 = vpack.c.b16 %v1131, %v1128
        %v1174 = vpack.c.b16 %v1132, %v1129
        %v1175 = vpack.c.b16 %v1133, %v1130
        %v1176 = vpack.c.b16 %v1137, %v1134
        %v1177 = vpack.c.b16 %v1138, %v1135
        %v1178 = vpack.c.b16 %v1139, %v1136
        %v1179 = vpack.c.b16 %v1143, %v1140
        %v1180 = vpack.c.b16 %v1144, %v1141
        %v1181 = vpack.c.b16 %v1145, %v1142
        %v1182 = vpack.c.b16 %v1149, %v1146
        %v1183 = vpack.c.b16 %v1150, %v1147
        %v1184 = vpack.c.b16 %v1151, %v1148
        %v1185 = vpack.c.b16 %v1155, %v1152
        %v1186 = vpack.c.b16 %v1156, %v1153
        %v1187 = vpack.c.b16 %v1157, %v1154
        %v1188 = vpack.c.b16 %v1161, %v1158
        %v1189 = vpack.c.b16 %v1162, %v1159
        %v1190 = vpack.c.b16 %v1163, %v1160
        %v1191 = vpack.c.b16 %v1167, %v1164
        %v1192 = vpack.c.b16 %v1168, %v1165
        %v1193 = vpack.c.b16 %v1169, %v1166
        %1218 = vmatpush.bf16.msra.mxu0 %v1191
        %1219 = vmatpush.bf16.msra.mxu0 %v1188
        %1220 = vmatpush.bf16.msra.mxu0 %v1185
        %1221 = vmatpush.bf16.msra.mxu0 %v1182
        %1222 = vmatpush.bf16.msra.mxu0 %v1179
        %1223 = vmatpush.bf16.msra.mxu0 %v1176
        %1224 = vmatpush.bf16.msra.mxu0 %v1173
        %1225 = vmatpush.bf16.msra.mxu0 %v1170
        %1226 = vmatmul.bf16.gmra.mxu0 %v1081
        %v1227 = vpop.f32.mrf.mxu0
        %v1228 = vadd.f32 %v1084, %v1227
        %v1229 = vpop.f32.mrf.mxu0
        %v1230 = vadd.f32 %v1084, %v1229
        %1231 = vmatmul.bf16.gmra.mxu0 %v1082
        %v1232 = vpop.f32.mrf.mxu0
        %v1233 = vadd.f32 %v1084, %v1232
        %v1234 = vpop.f32.mrf.mxu0
        %v1235 = vadd.f32 %v1084, %v1234
        %1236 = vdwg.mxu0
        %1237 = vmatpush.bf16.msra.mxu0 %v1192
        %1238 = vmatpush.bf16.msra.mxu0 %v1189
        %1239 = vmatpush.bf16.msra.mxu0 %v1186
        %1240 = vmatpush.bf16.msra.mxu0 %v1183
        %1241 = vmatpush.bf16.msra.mxu0 %v1180
        %1242 = vmatpush.bf16.msra.mxu0 %v1177
        %1243 = vmatpush.bf16.msra.mxu0 %v1174
        %1244 = vmatpush.bf16.msra.mxu0 %v1171
        %1245 = vmatmul.bf16.gmra.mxu0 %v1081
        %v1246 = vpop.f32.mrf.mxu0
        %v1247 = vadd.f32 %v1085, %v1246
        %v1248 = vpop.f32.mrf.mxu0
        %v1249 = vadd.f32 %v1085, %v1248
        %1250 = vmatmul.bf16.gmra.mxu0 %v1082
        %v1251 = vpop.f32.mrf.mxu0
        %v1252 = vadd.f32 %v1085, %v1251
        %v1253 = vpop.f32.mrf.mxu0
        %v1254 = vadd.f32 %v1085, %v1253
        %1255 = vdwg.mxu0
        %1256 = vmatpush.bf16.msra.mxu0 %v1193
        %1257 = vmatpush.bf16.msra.mxu0 %v1190
        %1258 = vmatpush.bf16.msra.mxu0 %v1187
        %1259 = vmatpush.bf16.msra.mxu0 %v1184
        %1260 = vmatpush.bf16.msra.mxu0 %v1181
        %1261 = vmatpush.bf16.msra.mxu0 %v1178
        %1262 = vmatpush.bf16.msra.mxu0 %v1175
        %1263 = vmatpush.bf16.msra.mxu0 %v1172
        %1264 = vmatmul.bf16.gmra.mxu0 %v1081
        %v1265 = vpop.f32.mrf.mxu0
        %v1266 = vadd.f32 %v1086, %v1265
        %v1267 = vpop.f32.mrf.mxu0
        %v1268 = vadd.f32 %v1086, %v1267
        %1269 = vmatmul.bf16.gmra.mxu0 %v1082
        %v1270 = vpop.f32.mrf.mxu0
        %v1271 = vadd.f32 %v1086, %v1270
        %v1272 = vpop.f32.mrf.mxu0
        %v1273 = vadd.f32 %v1086, %v1272
        %1274 = vdwg.mxu0
        %1275 = vst [vmem:[%s363] sm:$0xff] %v1228
        %1276 = vst [vmem:[%s363 + $0x8] sm:$0xff] %v1247
        %1277 = vst [vmem:[%s363 + $0x10] sm:$0xff] %v1266
        %1278 = vst [vmem:[%s363 + $0x18] sm:$0xff] %v1230
        %1279 = vst [vmem:[%s363 + $0x20] sm:$0xff] %v1249
        %1280 = vst [vmem:[%s363 + $0x28] sm:$0xff] %v1268
        %1281 = vst [vmem:[%s363 + $0x30] sm:$0xff] %v1233
        %1282 = vst [vmem:[%s363 + $0x38] sm:$0xff] %v1252
        %1283 = vst [vmem:[%s363 + $0x40] sm:$0xff] %v1271
        %1284 = vst [vmem:[%s363 + $0x48] sm:$0xff] %v1235
        %1285 = vst [vmem:[%s363 + $0x50] sm:$0xff] %v1254
        %1286 = vst [vmem:[%s363 + $0x58] sm:$0xff] %v1273
        %v1287 = vld [vmem:[%s312 + $0x30] sm:$0xff]
        %v1288 = vld [vmem:[%s312 + $0x38] sm:$0xf]
        %v1289 = vld [vmem:[%s312 + $0x3c] sm:$0xff]
        %v1290 = vld [vmem:[%s312 + $0x44] sm:$0xf]
        %v1291 = vld [vmem:[%s312 + $0x48] sm:$0xff]
        %v1292 = vld [vmem:[%s312 + $0x50] sm:$0xf]
        %v1293 = vld [vmem:[%s312 + $0x54] sm:$0xff]
        %v1294 = vld [vmem:[%s312 + $0x5c] sm:$0xf]
        %v1303 = vunpack.c.l.b16 %v1287
        %v1304 = vunpack.c.h.b16 %v1287
        %v1305 = vunpack.c.l.b16 %v1288
        %v1306 = vunpack.c.l.b16 %v1289
        %v1307 = vunpack.c.h.b16 %v1289
        %v1308 = vunpack.c.l.b16 %v1290
        %v1309 = vunpack.c.l.b16 %v1291
        %v1310 = vunpack.c.h.b16 %v1291
        %v1311 = vunpack.c.l.b16 %v1292
        %v1312 = vunpack.c.l.b16 %v1293
        %v1313 = vunpack.c.h.b16 %v1293
        %v1314 = vunpack.c.l.b16 %v1294
        %v1315 = vpack.c.b16 %v1306, %v1303
        %v1316 = vpack.c.b16 %v1307, %v1304
        %v1317 = vpack.c.b16 %v1308, %v1305
        %v1318 = vpack.c.b16 %v1312, %v1309
        %v1319 = vpack.c.b16 %v1313, %v1310
        %v1320 = vpack.c.b16 %v1314, %v1311
        %1327 = vmatpush.bf16.msra.mxu0 %v684
        %1328 = vmatpush.bf16.msra.mxu0 %v682
        %1329 = vmatpush.bf16.msra.mxu0 %v680
        %1330 = vmatpush.bf16.msra.mxu0 %v678
        %1331 = vmatpush.bf16.msra.mxu0 %v676
        %1332 = vmatpush.bf16.msra.mxu0 %v674
        %1333 = vmatpush.bf16.msra.mxu0 %v672
        %1334 = vmatpush.bf16.msra.mxu0 %v670
        %1335 = vmatmul.bf16.gmra.mxu0 %v1315
        %v1336 = vpop.f32.mrf.mxu0
        %v1337 = vadd.f32 %v490, %v1336
        %v1338 = vpop.f32.mrf.mxu0
        %v1339 = vadd.f32 %v490, %v1338
        %1340 = vmatmul.bf16.gmra.mxu0 %v1318
        %v1341 = vpop.f32.mrf.mxu0
        %v1342 = vadd.f32 %v490, %v1341
        %v1343 = vpop.f32.mrf.mxu0
        %v1344 = vadd.f32 %v490, %v1343
        %1345 = vdwg.mxu0
        %1346 = vmatpush.bf16.msra.mxu0 %v700
        %1347 = vmatpush.bf16.msra.mxu0 %v698
        %1348 = vmatpush.bf16.msra.mxu0 %v696
        %1349 = vmatpush.bf16.msra.mxu0 %v694
        %1350 = vmatpush.bf16.msra.mxu0 %v692
        %1351 = vmatpush.bf16.msra.mxu0 %v690
        %1352 = vmatpush.bf16.msra.mxu0 %v688
        %1353 = vmatpush.bf16.msra.mxu0 %v686
        %1354 = vmatmul.bf16.gmra.mxu0 %v1316
        %v1355 = vpop.f32.mrf.mxu0
        %v1356 = vadd.f32 %v1337, %v1355
        %v1357 = vpop.f32.mrf.mxu0
        %v1358 = vadd.f32 %v1339, %v1357
        %1359 = vmatmul.bf16.gmra.mxu0 %v1319
        %v1360 = vpop.f32.mrf.mxu0
        %v1361 = vadd.f32 %v1342, %v1360
        %v1362 = vpop.f32.mrf.mxu0
        %v1363 = vadd.f32 %v1344, %v1362
        %1364 = vdwg.mxu0
        %1365 = vmatpush.bf16.msra.mxu0 %v716
        %1366 = vmatpush.bf16.msra.mxu0 %v714
        %1367 = vmatpush.bf16.msra.mxu0 %v712
        %1368 = vmatpush.bf16.msra.mxu0 %v710
        %1369 = vmatpush.bf16.msra.mxu0 %v708
        %1370 = vmatpush.bf16.msra.mxu0 %v706
        %1371 = vmatpush.bf16.msra.mxu0 %v704
        %1372 = vmatpush.bf16.msra.mxu0 %v702
        %1373 = vmatmul.bf16.gmra.mxu0 %v1317
        %v1374 = vpop.f32.mrf.mxu0
        %v1375 = vadd.f32 %v1356, %v1374
        %v1376 = vpop.f32.mrf.mxu0
        %v1377 = vadd.f32 %v1358, %v1376
        %1378 = vmatmul.bf16.gmra.mxu0 %v1320
        %v1379 = vpop.f32.mrf.mxu0
        %v1380 = vadd.f32 %v1361, %v1379
        %v1381 = vpop.f32.mrf.mxu0
        %v1382 = vadd.f32 %v1363, %v1381
        %1383 = vdwg.mxu0
        %1384 = vmatpush.bf16.msra.mxu0 %v685
        %1385 = vmatpush.bf16.msra.mxu0 %v683
        %1386 = vmatpush.bf16.msra.mxu0 %v681
        %1387 = vmatpush.bf16.msra.mxu0 %v679
        %1388 = vmatpush.bf16.msra.mxu0 %v677
        %1389 = vmatpush.bf16.msra.mxu0 %v675
        %1390 = vmatpush.bf16.msra.mxu0 %v673
        %1391 = vmatpush.bf16.msra.mxu0 %v671
        %1392 = vmatmul.bf16.gmra.mxu0 %v1315
        %v1393 = vpop.f32.mrf.mxu0
        %v1394 = vadd.f32 %v491, %v1393
        %v1395 = vpop.f32.mrf.mxu0
        %v1396 = vadd.f32 %v491, %v1395
        %1397 = vmatmul.bf16.gmra.mxu0 %v1318
        %v1398 = vpop.f32.mrf.mxu0
        %v1399 = vadd.f32 %v491, %v1398
        %v1400 = vpop.f32.mrf.mxu0
        %v1401 = vadd.f32 %v491, %v1400
        %1402 = vdwg.mxu0
        %1403 = vmatpush.bf16.msra.mxu0 %v701
        %1404 = vmatpush.bf16.msra.mxu0 %v699
        %1405 = vmatpush.bf16.msra.mxu0 %v697
        %1406 = vmatpush.bf16.msra.mxu0 %v695
        %1407 = vmatpush.bf16.msra.mxu0 %v693
        %1408 = vmatpush.bf16.msra.mxu0 %v691
        %1409 = vmatpush.bf16.msra.mxu0 %v689
        %1410 = vmatpush.bf16.msra.mxu0 %v687
        %1411 = vmatmul.bf16.gmra.mxu0 %v1316
        %v1412 = vpop.f32.mrf.mxu0
        %v1413 = vadd.f32 %v1394, %v1412
        %v1414 = vpop.f32.mrf.mxu0
        %v1415 = vadd.f32 %v1396, %v1414
        %1416 = vmatmul.bf16.gmra.mxu0 %v1319
        %v1417 = vpop.f32.mrf.mxu0
        %v1418 = vadd.f32 %v1399, %v1417
        %v1419 = vpop.f32.mrf.mxu0
        %v1420 = vadd.f32 %v1401, %v1419
        %1421 = vdwg.mxu0
        %1422 = vmatpush.bf16.msra.mxu0 %v717
        %1423 = vmatpush.bf16.msra.mxu0 %v715
        %1424 = vmatpush.bf16.msra.mxu0 %v713
        %1425 = vmatpush.bf16.msra.mxu0 %v711
        %1426 = vmatpush.bf16.msra.mxu0 %v709
        %1427 = vmatpush.bf16.msra.mxu0 %v707
        %1428 = vmatpush.bf16.msra.mxu0 %v705
        %1429 = vmatpush.bf16.msra.mxu0 %v703
        %1430 = vmatmul.bf16.gmra.mxu0 %v1317
        %v1431 = vpop.f32.mrf.mxu0
        %v1432 = vadd.f32 %v1413, %v1431
        %v1433 = vpop.f32.mrf.mxu0
        %v1434 = vadd.f32 %v1415, %v1433
        %1435 = vmatmul.bf16.gmra.mxu0 %v1320
        %v1436 = vpop.f32.mrf.mxu0
        %v1437 = vadd.f32 %v1418, %v1436
        %v1438 = vpop.f32.mrf.mxu0
        %v1439 = vadd.f32 %v1420, %v1438
        %1440 = vdwg.mxu0
        %vm1441 = vcmp.gt.f32.partialorder %v1375, 0.0
        %vm1442 = vcmp.gt.f32.partialorder %v1432, 0.0
        %vm1443 = vcmp.gt.f32.partialorder %v1377, 0.0
        %vm1444 = vcmp.gt.f32.partialorder %v1434, 0.0
        %vm1445 = vcmp.gt.f32.partialorder %v1380, 0.0
        %vm1446 = vcmp.gt.f32.partialorder %v1437, 0.0
        %vm1447 = vcmp.gt.f32.partialorder %v1382, 0.0
        %vm1448 = vcmp.gt.f32.partialorder %v1439, 0.0
        %v1449 = vmul.f32 %v1375, 1.442695
        %v1450 = vpow.pop %v1449
        %v1451 = vmul.f32 %v1432, 1.442695
        %v1452 = vpow.pop %v1451
        %v1453 = vmul.f32 %v1377, 1.442695
        %v1454 = vpow.pop %v1453
        %v1455 = vmul.f32 %v1434, 1.442695
        %v1456 = vpow.pop %v1455
        %v1457 = vmul.f32 %v1380, 1.442695
        %v1458 = vpow.pop %v1457
        %v1459 = vmul.f32 %v1437, 1.442695
        %v1460 = vpow.pop %v1459
        %v1461 = vmul.f32 %v1382, 1.442695
        %v1462 = vpow.pop %v1461
        %v1463 = vmul.f32 %v1439, 1.442695
        %v1464 = vpow.pop %v1463
        %v1465 = vsub.f32 %v1450, 1.0
        %v1466 = vsub.f32 %v1452, 1.0
        %v1467 = vsub.f32 %v1454, 1.0
        %v1468 = vsub.f32 %v1456, 1.0
        %v1469 = vsub.f32 %v1458, 1.0
        %v1470 = vsub.f32 %v1460, 1.0
        %v1471 = vsub.f32 %v1462, 1.0
        %v1472 = vsub.f32 %v1464, 1.0
        %v1473 = vsel %vm1441, %v1375, %v1465
        %v1474 = vsel %vm1442, %v1432, %v1466
        %v1475 = vsel %vm1443, %v1377, %v1467
        %v1476 = vsel %vm1444, %v1434, %v1468
        %v1477 = vsel %vm1445, %v1380, %v1469
        %v1478 = vsel %vm1446, %v1437, %v1470
        %v1479 = vsel %vm1447, %v1382, %v1471
        %v1480 = vsel %vm1448, %v1439, %v1472
        %v1481 = vpack.c.bf16 %v1475, %v1473
        %v1482 = vpack.c.bf16 %v1476, %v1474
        %v1483 = vpack.c.bf16 %v1479, %v1477
        %v1484 = vpack.c.bf16 %v1480, %v1478
        %1485 = vmatpush.bf16.msra.mxu0 %v998
        %1486 = vmatpush.bf16.msra.mxu0 %v997
        %1487 = vmatpush.bf16.msra.mxu0 %v996
        %1488 = vmatpush.bf16.msra.mxu0 %v995
        %1489 = vmatpush.bf16.msra.mxu0 %v994
        %1490 = vmatpush.bf16.msra.mxu0 %v993
        %1491 = vmatpush.bf16.msra.mxu0 %v992
        %1492 = vmatpush.bf16.msra.mxu0 %v991
        %1493 = vmatmul.bf16.gmra.mxu0 %v1481
        %v1494 = vpop.f32.mrf.mxu0
        %v1495 = vadd.f32 %v925, %v1494
        %v1496 = vpop.f32.mrf.mxu0
        %v1497 = vadd.f32 %v925, %v1496
        %1498 = vmatmul.bf16.gmra.mxu0 %v1483
        %v1499 = vpop.f32.mrf.mxu0
        %v1500 = vadd.f32 %v925, %v1499
        %v1501 = vpop.f32.mrf.mxu0
        %v1502 = vadd.f32 %v925, %v1501
        %1503 = vdwg.mxu0
        %1504 = vmatpush.bf16.msra.mxu0 %v1006
        %1505 = vmatpush.bf16.msra.mxu0 %v1005
        %1506 = vmatpush.bf16.msra.mxu0 %v1004
        %1507 = vmatpush.bf16.msra.mxu0 %v1003
        %1508 = vmatpush.bf16.msra.mxu0 %v1002
        %1509 = vmatpush.bf16.msra.mxu0 %v1001
        %1510 = vmatpush.bf16.msra.mxu0 %v1000
        %1511 = vmatpush.bf16.msra.mxu0 %v999
        %1512 = vmatmul.bf16.gmra.mxu0 %v1482
        %v1513 = vpop.f32.mrf.mxu0
        %v1514 = vadd.f32 %v1495, %v1513
        %v1515 = vpop.f32.mrf.mxu0
        %v1516 = vadd.f32 %v1497, %v1515
        %1517 = vmatmul.bf16.gmra.mxu0 %v1484
        %v1518 = vpop.f32.mrf.mxu0
        %v1519 = vadd.f32 %v1500, %v1518
        %v1520 = vpop.f32.mrf.mxu0
        %v1521 = vadd.f32 %v1502, %v1520
        %1522 = vdwg.mxu0
        %vm1523 = vcmp.gt.f32.partialorder %v1514, 0.0
        %vm1524 = vcmp.gt.f32.partialorder %v1516, 0.0
        %vm1525 = vcmp.gt.f32.partialorder %v1519, 0.0
        %vm1526 = vcmp.gt.f32.partialorder %v1521, 0.0
        %v1527 = vmul.f32 %v1514, 1.442695
        %v1528 = vpow.pop %v1527
        %v1529 = vmul.f32 %v1516, 1.442695
        %v1530 = vpow.pop %v1529
        %v1531 = vmul.f32 %v1519, 1.442695
        %v1532 = vpow.pop %v1531
        %v1533 = vmul.f32 %v1521, 1.442695
        %v1534 = vpow.pop %v1533
        %v1535 = vsub.f32 %v1528, 1.0
        %v1536 = vsub.f32 %v1530, 1.0
        %v1537 = vsub.f32 %v1532, 1.0
        %v1538 = vsub.f32 %v1534, 1.0
        %v1539 = vsel %vm1523, %v1514, %v1535
        %v1540 = vsel %vm1524, %v1516, %v1536
        %v1541 = vsel %vm1525, %v1519, %v1537
        %v1542 = vsel %vm1526, %v1521, %v1538
        %v1543 = vpack.c.bf16 %v1540, %v1539
        %v1544 = vpack.c.bf16 %v1542, %v1541
        %1545 = vmatpush.bf16.msra.mxu0 %v1191
        %1546 = vmatpush.bf16.msra.mxu0 %v1188
        %1547 = vmatpush.bf16.msra.mxu0 %v1185
        %1548 = vmatpush.bf16.msra.mxu0 %v1182
        %1549 = vmatpush.bf16.msra.mxu0 %v1179
        %1550 = vmatpush.bf16.msra.mxu0 %v1176
        %1551 = vmatpush.bf16.msra.mxu0 %v1173
        %1552 = vmatpush.bf16.msra.mxu0 %v1170
        %1553 = vmatmul.bf16.gmra.mxu0 %v1543
        %v1554 = vpop.f32.mrf.mxu0
        %v1555 = vadd.f32 %v1084, %v1554
        %v1556 = vpop.f32.mrf.mxu0
        %v1557 = vadd.f32 %v1084, %v1556
        %1558 = vmatmul.bf16.gmra.mxu0 %v1544
        %v1559 = vpop.f32.mrf.mxu0
        %v1560 = vadd.f32 %v1084, %v1559
        %v1561 = vpop.f32.mrf.mxu0
        %v1562 = vadd.f32 %v1084, %v1561
        %1563 = vdwg.mxu0
        %1564 = vmatpush.bf16.msra.mxu0 %v1192
        %1565 = vmatpush.bf16.msra.mxu0 %v1189
        %1566 = vmatpush.bf16.msra.mxu0 %v1186
        %1567 = vmatpush.bf16.msra.mxu0 %v1183
        %1568 = vmatpush.bf16.msra.mxu0 %v1180
        %1569 = vmatpush.bf16.msra.mxu0 %v1177
        %1570 = vmatpush.bf16.msra.mxu0 %v1174
        %1571 = vmatpush.bf16.msra.mxu0 %v1171
        %1572 = vmatmul.bf16.gmra.mxu0 %v1543
        %v1573 = vpop.f32.mrf.mxu0
        %v1574 = vadd.f32 %v1085, %v1573
        %v1575 = vpop.f32.mrf.mxu0
        %v1576 = vadd.f32 %v1085, %v1575
        %1577 = vmatmul.bf16.gmra.mxu0 %v1544
        %v1578 = vpop.f32.mrf.mxu0
        %v1579 = vadd.f32 %v1085, %v1578
        %v1580 = vpop.f32.mrf.mxu0
        %v1581 = vadd.f32 %v1085, %v1580
        %1582 = vdwg.mxu0
        %1583 = vmatpush.bf16.msra.mxu0 %v1193
        %1584 = vmatpush.bf16.msra.mxu0 %v1190
        %1585 = vmatpush.bf16.msra.mxu0 %v1187
        %1586 = vmatpush.bf16.msra.mxu0 %v1184
        %1587 = vmatpush.bf16.msra.mxu0 %v1181
        %1588 = vmatpush.bf16.msra.mxu0 %v1178
        %1589 = vmatpush.bf16.msra.mxu0 %v1175
        %1590 = vmatpush.bf16.msra.mxu0 %v1172
        %1591 = vmatmul.bf16.gmra.mxu0 %v1543
        %v1592 = vpop.f32.mrf.mxu0
        %v1593 = vadd.f32 %v1086, %v1592
        %v1594 = vpop.f32.mrf.mxu0
        %v1595 = vadd.f32 %v1086, %v1594
        %1596 = vmatmul.bf16.gmra.mxu0 %v1544
        %v1597 = vpop.f32.mrf.mxu0
        %v1598 = vadd.f32 %v1086, %v1597
        %v1599 = vpop.f32.mrf.mxu0
        %v1600 = vadd.f32 %v1086, %v1599
        %1601 = vdwg.mxu0
        %1602 = vst [vmem:[%s363 + $0x60] sm:$0xff] %v1555
        %1603 = vst [vmem:[%s363 + $0x68] sm:$0xff] %v1574
        %1604 = vst [vmem:[%s363 + $0x70] sm:$0xff] %v1593
        %1605 = vst [vmem:[%s363 + $0x78] sm:$0xff] %v1557
        %1606 = vst [vmem:[%s363 + $0x80] sm:$0xff] %v1576
        %1607 = vst [vmem:[%s363 + $0x88] sm:$0xff] %v1595
        %1608 = vst [vmem:[%s363 + $0x90] sm:$0xff] %v1560
        %1609 = vst [vmem:[%s363 + $0x98] sm:$0xff] %v1579
        %1610 = vst [vmem:[%s363 + $0xa0] sm:$0xff] %v1598
        %1611 = vst [vmem:[%s363 + $0xa8] sm:$0xff] %v1562
        %1612 = vst [vmem:[%s363 + $0xb0] sm:$0xff] %v1581
        %1613 = vst [vmem:[%s363 + $0xb8] sm:$0xff] %v1600
        %v1614 = vld [vmem:[%s312 + $0x60] sm:$0xff]
        %v1615 = vld [vmem:[%s312 + $0x68] sm:$0xf]
        %v1616 = vld [vmem:[%s312 + $0x6c] sm:$0xff]
        %v1617 = vld [vmem:[%s312 + $0x74] sm:$0xf]
        %v1618 = vld [vmem:[%s312 + $0x78] sm:$0xff]
        %v1619 = vld [vmem:[%s312 + $0x80] sm:$0xf]
        %v1620 = vld [vmem:[%s312 + $0x84] sm:$0xff]
        %v1621 = vld [vmem:[%s312 + $0x8c] sm:$0xf]
        %v1630 = vunpack.c.l.b16 %v1614
        %v1631 = vunpack.c.h.b16 %v1614
        %v1632 = vunpack.c.l.b16 %v1615
        %v1633 = vunpack.c.l.b16 %v1616
        %v1634 = vunpack.c.h.b16 %v1616
        %v1635 = vunpack.c.l.b16 %v1617
        %v1636 = vunpack.c.l.b16 %v1618
        %v1637 = vunpack.c.h.b16 %v1618
        %v1638 = vunpack.c.l.b16 %v1619
        %v1639 = vunpack.c.l.b16 %v1620
        %v1640 = vunpack.c.h.b16 %v1620
        %v1641 = vunpack.c.l.b16 %v1621
        %v1642 = vpack.c.b16 %v1633, %v1630
        %v1643 = vpack.c.b16 %v1634, %v1631
        %v1644 = vpack.c.b16 %v1635, %v1632
        %v1645 = vpack.c.b16 %v1639, %v1636
        %v1646 = vpack.c.b16 %v1640, %v1637
        %v1647 = vpack.c.b16 %v1641, %v1638
        %1654 = vmatpush.bf16.msra.mxu0 %v684
        %1655 = vmatpush.bf16.msra.mxu0 %v682
        %1656 = vmatpush.bf16.msra.mxu0 %v680
        %1657 = vmatpush.bf16.msra.mxu0 %v678
        %1658 = vmatpush.bf16.msra.mxu0 %v676
        %1659 = vmatpush.bf16.msra.mxu0 %v674
        %1660 = vmatpush.bf16.msra.mxu0 %v672
        %1661 = vmatpush.bf16.msra.mxu0 %v670
        %1662 = vmatmul.bf16.gmra.mxu0 %v1642
        %v1663 = vpop.f32.mrf.mxu0
        %v1664 = vadd.f32 %v490, %v1663
        %v1665 = vpop.f32.mrf.mxu0
        %v1666 = vadd.f32 %v490, %v1665
        %1667 = vmatmul.bf16.gmra.mxu0 %v1645
        %v1668 = vpop.f32.mrf.mxu0
        %v1669 = vadd.f32 %v490, %v1668
        %v1670 = vpop.f32.mrf.mxu0
        %v1671 = vadd.f32 %v490, %v1670
        %1672 = vdwg.mxu0
        %1673 = vmatpush.bf16.msra.mxu0 %v700
        %1674 = vmatpush.bf16.msra.mxu0 %v698
        %1675 = vmatpush.bf16.msra.mxu0 %v696
        %1676 = vmatpush.bf16.msra.mxu0 %v694
        %1677 = vmatpush.bf16.msra.mxu0 %v692
        %1678 = vmatpush.bf16.msra.mxu0 %v690
        %1679 = vmatpush.bf16.msra.mxu0 %v688
        %1680 = vmatpush.bf16.msra.mxu0 %v686
        %1681 = vmatmul.bf16.gmra.mxu0 %v1643
        %v1682 = vpop.f32.mrf.mxu0
        %v1683 = vadd.f32 %v1664, %v1682
        %v1684 = vpop.f32.mrf.mxu0
        %v1685 = vadd.f32 %v1666, %v1684
        %1686 = vmatmul.bf16.gmra.mxu0 %v1646
        %v1687 = vpop.f32.mrf.mxu0
        %v1688 = vadd.f32 %v1669, %v1687
        %v1689 = vpop.f32.mrf.mxu0
        %v1690 = vadd.f32 %v1671, %v1689
        %1691 = vdwg.mxu0
        %1692 = vmatpush.bf16.msra.mxu0 %v716
        %1693 = vmatpush.bf16.msra.mxu0 %v714
        %1694 = vmatpush.bf16.msra.mxu0 %v712
        %1695 = vmatpush.bf16.msra.mxu0 %v710
        %1696 = vmatpush.bf16.msra.mxu0 %v708
        %1697 = vmatpush.bf16.msra.mxu0 %v706
        %1698 = vmatpush.bf16.msra.mxu0 %v704
        %1699 = vmatpush.bf16.msra.mxu0 %v702
        %1700 = vmatmul.bf16.gmra.mxu0 %v1644
        %v1701 = vpop.f32.mrf.mxu0
        %v1702 = vadd.f32 %v1683, %v1701
        %v1703 = vpop.f32.mrf.mxu0
        %v1704 = vadd.f32 %v1685, %v1703
        %1705 = vmatmul.bf16.gmra.mxu0 %v1647
        %v1706 = vpop.f32.mrf.mxu0
        %v1707 = vadd.f32 %v1688, %v1706
        %v1708 = vpop.f32.mrf.mxu0
        %v1709 = vadd.f32 %v1690, %v1708
        %1710 = vdwg.mxu0
        %1711 = vmatpush.bf16.msra.mxu0 %v685
        %1712 = vmatpush.bf16.msra.mxu0 %v683
        %1713 = vmatpush.bf16.msra.mxu0 %v681
        %1714 = vmatpush.bf16.msra.mxu0 %v679
        %1715 = vmatpush.bf16.msra.mxu0 %v677
        %1716 = vmatpush.bf16.msra.mxu0 %v675
        %1717 = vmatpush.bf16.msra.mxu0 %v673
        %1718 = vmatpush.bf16.msra.mxu0 %v671
        %1719 = vmatmul.bf16.gmra.mxu0 %v1642
        %v1720 = vpop.f32.mrf.mxu0
        %v1721 = vadd.f32 %v491, %v1720
        %v1722 = vpop.f32.mrf.mxu0
        %v1723 = vadd.f32 %v491, %v1722
        %1724 = vmatmul.bf16.gmra.mxu0 %v1645
        %v1725 = vpop.f32.mrf.mxu0
        %v1726 = vadd.f32 %v491, %v1725
        %v1727 = vpop.f32.mrf.mxu0
        %v1728 = vadd.f32 %v491, %v1727
        %1729 = vdwg.mxu0
        %1730 = vmatpush.bf16.msra.mxu0 %v701
        %1731 = vmatpush.bf16.msra.mxu0 %v699
        %1732 = vmatpush.bf16.msra.mxu0 %v697
        %1733 = vmatpush.bf16.msra.mxu0 %v695
        %1734 = vmatpush.bf16.msra.mxu0 %v693
        %1735 = vmatpush.bf16.msra.mxu0 %v691
        %1736 = vmatpush.bf16.msra.mxu0 %v689
        %1737 = vmatpush.bf16.msra.mxu0 %v687
        %1738 = vmatmul.bf16.gmra.mxu0 %v1643
        %v1739 = vpop.f32.mrf.mxu0
        %v1740 = vadd.f32 %v1721, %v1739
        %v1741 = vpop.f32.mrf.mxu0
        %v1742 = vadd.f32 %v1723, %v1741
        %1743 = vmatmul.bf16.gmra.mxu0 %v1646
        %v1744 = vpop.f32.mrf.mxu0
        %v1745 = vadd.f32 %v1726, %v1744
        %v1746 = vpop.f32.mrf.mxu0
        %v1747 = vadd.f32 %v1728, %v1746
        %1748 = vdwg.mxu0
        %1749 = vmatpush.bf16.msra.mxu0 %v717
        %1750 = vmatpush.bf16.msra.mxu0 %v715
        %1751 = vmatpush.bf16.msra.mxu0 %v713
        %1752 = vmatpush.bf16.msra.mxu0 %v711
        %1753 = vmatpush.bf16.msra.mxu0 %v709
        %1754 = vmatpush.bf16.msra.mxu0 %v707
        %1755 = vmatpush.bf16.msra.mxu0 %v705
        %1756 = vmatpush.bf16.msra.mxu0 %v703
        %1757 = vmatmul.bf16.gmra.mxu0 %v1644
        %v1758 = vpop.f32.mrf.mxu0
        %v1759 = vadd.f32 %v1740, %v1758
        %v1760 = vpop.f32.mrf.mxu0
        %v1761 = vadd.f32 %v1742, %v1760
        %1762 = vmatmul.bf16.gmra.mxu0 %v1647
        %v1763 = vpop.f32.mrf.mxu0
        %v1764 = vadd.f32 %v1745, %v1763
        %v1765 = vpop.f32.mrf.mxu0
        %v1766 = vadd.f32 %v1747, %v1765
        %1767 = vdwg.mxu0
        %vm1768 = vcmp.gt.f32.partialorder %v1702, 0.0
        %vm1769 = vcmp.gt.f32.partialorder %v1759, 0.0
        %vm1770 = vcmp.gt.f32.partialorder %v1704, 0.0
        %vm1771 = vcmp.gt.f32.partialorder %v1761, 0.0
        %vm1772 = vcmp.gt.f32.partialorder %v1707, 0.0
        %vm1773 = vcmp.gt.f32.partialorder %v1764, 0.0
        %vm1774 = vcmp.gt.f32.partialorder %v1709, 0.0
        %vm1775 = vcmp.gt.f32.partialorder %v1766, 0.0
        %v1776 = vmul.f32 %v1702, 1.442695
        %v1777 = vpow.pop %v1776
        %v1778 = vmul.f32 %v1759, 1.442695
        %v1779 = vpow.pop %v1778
        %v1780 = vmul.f32 %v1704, 1.442695
        %v1781 = vpow.pop %v1780
        %v1782 = vmul.f32 %v1761, 1.442695
        %v1783 = vpow.pop %v1782
        %v1784 = vmul.f32 %v1707, 1.442695
        %v1785 = vpow.pop %v1784
        %v1786 = vmul.f32 %v1764, 1.442695
        %v1787 = vpow.pop %v1786
        %v1788 = vmul.f32 %v1709, 1.442695
        %v1789 = vpow.pop %v1788
        %v1790 = vmul.f32 %v1766, 1.442695
        %v1791 = vpow.pop %v1790
        %v1792 = vsub.f32 %v1777, 1.0
        %v1793 = vsub.f32 %v1779, 1.0
        %v1794 = vsub.f32 %v1781, 1.0
        %v1795 = vsub.f32 %v1783, 1.0
        %v1796 = vsub.f32 %v1785, 1.0
        %v1797 = vsub.f32 %v1787, 1.0
        %v1798 = vsub.f32 %v1789, 1.0
        %v1799 = vsub.f32 %v1791, 1.0
        %v1800 = vsel %vm1768, %v1702, %v1792
        %v1801 = vsel %vm1769, %v1759, %v1793
        %v1802 = vsel %vm1770, %v1704, %v1794
        %v1803 = vsel %vm1771, %v1761, %v1795
        %v1804 = vsel %vm1772, %v1707, %v1796
        %v1805 = vsel %vm1773, %v1764, %v1797
        %v1806 = vsel %vm1774, %v1709, %v1798
        %v1807 = vsel %vm1775, %v1766, %v1799
        %v1808 = vpack.c.bf16 %v1802, %v1800
        %v1809 = vpack.c.bf16 %v1803, %v1801
        %v1810 = vpack.c.bf16 %v1806, %v1804
        %v1811 = vpack.c.bf16 %v1807, %v1805
        %1812 = vmatpush.bf16.msra.mxu0 %v998
        %1813 = vmatpush.bf16.msra.mxu0 %v997
        %1814 = vmatpush.bf16.msra.mxu0 %v996
        %1815 = vmatpush.bf16.msra.mxu0 %v995
        %1816 = vmatpush.bf16.msra.mxu0 %v994
        %1817 = vmatpush.bf16.msra.mxu0 %v993
        %1818 = vmatpush.bf16.msra.mxu0 %v992
        %1819 = vmatpush.bf16.msra.mxu0 %v991
        %1820 = vmatmul.bf16.gmra.mxu0 %v1808
        %v1821 = vpop.f32.mrf.mxu0
        %v1822 = vadd.f32 %v925, %v1821
        %v1823 = vpop.f32.mrf.mxu0
        %v1824 = vadd.f32 %v925, %v1823
        %1825 = vmatmul.bf16.gmra.mxu0 %v1810
        %v1826 = vpop.f32.mrf.mxu0
        %v1827 = vadd.f32 %v925, %v1826
        %v1828 = vpop.f32.mrf.mxu0
        %v1829 = vadd.f32 %v925, %v1828
        %1830 = vdwg.mxu0
        %1831 = vmatpush.bf16.msra.mxu0 %v1006
        %1832 = vmatpush.bf16.msra.mxu0 %v1005
        %1833 = vmatpush.bf16.msra.mxu0 %v1004
        %1834 = vmatpush.bf16.msra.mxu0 %v1003
        %1835 = vmatpush.bf16.msra.mxu0 %v1002
        %1836 = vmatpush.bf16.msra.mxu0 %v1001
        %1837 = vmatpush.bf16.msra.mxu0 %v1000
        %1838 = vmatpush.bf16.msra.mxu0 %v999
        %1839 = vmatmul.bf16.gmra.mxu0 %v1809
        %v1840 = vpop.f32.mrf.mxu0
        %v1841 = vadd.f32 %v1822, %v1840
        %v1842 = vpop.f32.mrf.mxu0
        %v1843 = vadd.f32 %v1824, %v1842
        %1844 = vmatmul.bf16.gmra.mxu0 %v1811
        %v1845 = vpop.f32.mrf.mxu0
        %v1846 = vadd.f32 %v1827, %v1845
        %v1847 = vpop.f32.mrf.mxu0
        %v1848 = vadd.f32 %v1829, %v1847
        %1849 = vdwg.mxu0
        %vm1850 = vcmp.gt.f32.partialorder %v1841, 0.0
        %vm1851 = vcmp.gt.f32.partialorder %v1843, 0.0
        %vm1852 = vcmp.gt.f32.partialorder %v1846, 0.0
        %vm1853 = vcmp.gt.f32.partialorder %v1848, 0.0
        %v1854 = vmul.f32 %v1841, 1.442695
        %v1855 = vpow.pop %v1854
        %v1856 = vmul.f32 %v1843, 1.442695
        %v1857 = vpow.pop %v1856
        %v1858 = vmul.f32 %v1846, 1.442695
        %v1859 = vpow.pop %v1858
        %v1860 = vmul.f32 %v1848, 1.442695
        %v1861 = vpow.pop %v1860
        %v1862 = vsub.f32 %v1855, 1.0
        %v1863 = vsub.f32 %v1857, 1.0
        %v1864 = vsub.f32 %v1859, 1.0
        %v1865 = vsub.f32 %v1861, 1.0
        %v1866 = vsel %vm1850, %v1841, %v1862
        %v1867 = vsel %vm1851, %v1843, %v1863
        %v1868 = vsel %vm1852, %v1846, %v1864
        %v1869 = vsel %vm1853, %v1848, %v1865
        %v1870 = vpack.c.bf16 %v1867, %v1866
        %v1871 = vpack.c.bf16 %v1869, %v1868
        %1872 = vmatpush.bf16.msra.mxu0 %v1191
        %1873 = vmatpush.bf16.msra.mxu0 %v1188
        %1874 = vmatpush.bf16.msra.mxu0 %v1185
        %1875 = vmatpush.bf16.msra.mxu0 %v1182
        %1876 = vmatpush.bf16.msra.mxu0 %v1179
        %1877 = vmatpush.bf16.msra.mxu0 %v1176
        %1878 = vmatpush.bf16.msra.mxu0 %v1173
        %1879 = vmatpush.bf16.msra.mxu0 %v1170
        %1880 = vmatmul.bf16.gmra.mxu0 %v1870
        %v1881 = vpop.f32.mrf.mxu0
        %v1882 = vadd.f32 %v1084, %v1881
        %v1883 = vpop.f32.mrf.mxu0
        %v1884 = vadd.f32 %v1084, %v1883
        %1885 = vmatmul.bf16.gmra.mxu0 %v1871
        %v1886 = vpop.f32.mrf.mxu0
        %v1887 = vadd.f32 %v1084, %v1886
        %v1888 = vpop.f32.mrf.mxu0
        %v1889 = vadd.f32 %v1084, %v1888
        %1890 = vdwg.mxu0
        %1891 = vmatpush.bf16.msra.mxu0 %v1192
        %1892 = vmatpush.bf16.msra.mxu0 %v1189
        %1893 = vmatpush.bf16.msra.mxu0 %v1186
        %1894 = vmatpush.bf16.msra.mxu0 %v1183
        %1895 = vmatpush.bf16.msra.mxu0 %v1180
        %1896 = vmatpush.bf16.msra.mxu0 %v1177
        %1897 = vmatpush.bf16.msra.mxu0 %v1174
        %1898 = vmatpush.bf16.msra.mxu0 %v1171
        %1899 = vmatmul.bf16.gmra.mxu0 %v1870
        %v1900 = vpop.f32.mrf.mxu0
        %v1901 = vadd.f32 %v1085, %v1900
        %v1902 = vpop.f32.mrf.mxu0
        %v1903 = vadd.f32 %v1085, %v1902
        %1904 = vmatmul.bf16.gmra.mxu0 %v1871
        %v1905 = vpop.f32.mrf.mxu0
        %v1906 = vadd.f32 %v1085, %v1905
        %v1907 = vpop.f32.mrf.mxu0
        %v1908 = vadd.f32 %v1085, %v1907
        %1909 = vdwg.mxu0
        %1910 = vmatpush.bf16.msra.mxu0 %v1193
        %1911 = vmatpush.bf16.msra.mxu0 %v1190
        %1912 = vmatpush.bf16.msra.mxu0 %v1187
        %1913 = vmatpush.bf16.msra.mxu0 %v1184
        %1914 = vmatpush.bf16.msra.mxu0 %v1181
        %1915 = vmatpush.bf16.msra.mxu0 %v1178
        %1916 = vmatpush.bf16.msra.mxu0 %v1175
        %1917 = vmatpush.bf16.msra.mxu0 %v1172
        %1918 = vmatmul.bf16.gmra.mxu0 %v1870
        %v1919 = vpop.f32.mrf.mxu0
        %v1920 = vadd.f32 %v1086, %v1919
        %v1921 = vpop.f32.mrf.mxu0
        %v1922 = vadd.f32 %v1086, %v1921
        %1923 = vmatmul.bf16.gmra.mxu0 %v1871
        %v1924 = vpop.f32.mrf.mxu0
        %v1925 = vadd.f32 %v1086, %v1924
        %v1926 = vpop.f32.mrf.mxu0
        %v1927 = vadd.f32 %v1086, %v1926
        %1928 = vdwg.mxu0
        %1929 = vst [vmem:[%s363 + $0xc0] sm:$0xff] %v1882
        %1930 = vst [vmem:[%s363 + $0xc8] sm:$0xff] %v1901
        %1931 = vst [vmem:[%s363 + $0xd0] sm:$0xff] %v1920
        %1932 = vst [vmem:[%s363 + $0xd8] sm:$0xff] %v1884
        %1933 = vst [vmem:[%s363 + $0xe0] sm:$0xff] %v1903
        %1934 = vst [vmem:[%s363 + $0xe8] sm:$0xff] %v1922
        %1935 = vst [vmem:[%s363 + $0xf0] sm:$0xff] %v1887
        %1936 = vst [vmem:[%s363 + $0xf8] sm:$0xff] %v1906
        %1937 = vst [vmem:[%s363 + $0x100] sm:$0xff] %v1925
        %1938 = vst [vmem:[%s363 + $0x108] sm:$0xff] %v1889
        %1939 = vst [vmem:[%s363 + $0x110] sm:$0xff] %v1908
        %1940 = vst [vmem:[%s363 + $0x118] sm:$0xff] %v1927
        %v1941 = vld [vmem:[%s312 + $0x90] sm:$0xff]
        %v1942 = vld [vmem:[%s312 + $0x98] sm:$0xf]
        %v1943 = vld [vmem:[%s312 + $0x9c] sm:$0xff]
        %v1944 = vld [vmem:[%s312 + $0xa4] sm:$0xf]
        %v1945 = vld [vmem:[%s312 + $0xa8] sm:$0xff]
        %v1946 = vld [vmem:[%s312 + $0xb0] sm:$0xf]
        %v1947 = vld [vmem:[%s312 + $0xb4] sm:$0xff]
        %v1948 = vld [vmem:[%s312 + $0xbc] sm:$0xf]
        %v1957 = vunpack.c.l.b16 %v1941
        %v1958 = vunpack.c.h.b16 %v1941
        %v1959 = vunpack.c.l.b16 %v1942
        %v1960 = vunpack.c.l.b16 %v1943
        %v1961 = vunpack.c.h.b16 %v1943
        %v1962 = vunpack.c.l.b16 %v1944
        %v1963 = vunpack.c.l.b16 %v1945
        %v1964 = vunpack.c.h.b16 %v1945
        %v1965 = vunpack.c.l.b16 %v1946
        %v1966 = vunpack.c.l.b16 %v1947
        %v1967 = vunpack.c.h.b16 %v1947
        %v1968 = vunpack.c.l.b16 %v1948
        %v1969 = vpack.c.b16 %v1960, %v1957
        %v1970 = vpack.c.b16 %v1961, %v1958
        %v1971 = vpack.c.b16 %v1962, %v1959
        %v1972 = vpack.c.b16 %v1966, %v1963
        %v1973 = vpack.c.b16 %v1967, %v1964
        %v1974 = vpack.c.b16 %v1968, %v1965
        %1981 = vmatpush.bf16.msra.mxu0 %v684
        %1982 = vmatpush.bf16.msra.mxu0 %v682
        %1983 = vmatpush.bf16.msra.mxu0 %v680
        %1984 = vmatpush.bf16.msra.mxu0 %v678
        %1985 = vmatpush.bf16.msra.mxu0 %v676
        %1986 = vmatpush.bf16.msra.mxu0 %v674
        %1987 = vmatpush.bf16.msra.mxu0 %v672
        %1988 = vmatpush.bf16.msra.mxu0 %v670
        %1989 = vmatmul.bf16.gmra.mxu0 %v1969
        %v1990 = vpop.f32.mrf.mxu0
        %v1991 = vadd.f32 %v490, %v1990
        %v1992 = vpop.f32.mrf.mxu0
        %v1993 = vadd.f32 %v490, %v1992
        %1994 = vmatmul.bf16.gmra.mxu0 %v1972
        %v1995 = vpop.f32.mrf.mxu0
        %v1996 = vadd.f32 %v490, %v1995
        %v1997 = vpop.f32.mrf.mxu0
        %v1998 = vadd.f32 %v490, %v1997
        %1999 = vdwg.mxu0
        %2000 = vmatpush.bf16.msra.mxu0 %v700
        %2001 = vmatpush.bf16.msra.mxu0 %v698
        %2002 = vmatpush.bf16.msra.mxu0 %v696
        %2003 = vmatpush.bf16.msra.mxu0 %v694
        %2004 = vmatpush.bf16.msra.mxu0 %v692
        %2005 = vmatpush.bf16.msra.mxu0 %v690
        %2006 = vmatpush.bf16.msra.mxu0 %v688
        %2007 = vmatpush.bf16.msra.mxu0 %v686
        %2008 = vmatmul.bf16.gmra.mxu0 %v1970
        %v2009 = vpop.f32.mrf.mxu0
        %v2010 = vadd.f32 %v1991, %v2009
        %v2011 = vpop.f32.mrf.mxu0
        %v2012 = vadd.f32 %v1993, %v2011
        %2013 = vmatmul.bf16.gmra.mxu0 %v1973
        %v2014 = vpop.f32.mrf.mxu0
        %v2015 = vadd.f32 %v1996, %v2014
        %v2016 = vpop.f32.mrf.mxu0
        %v2017 = vadd.f32 %v1998, %v2016
        %2018 = vdwg.mxu0
        %2019 = vmatpush.bf16.msra.mxu0 %v716
        %2020 = vmatpush.bf16.msra.mxu0 %v714
        %2021 = vmatpush.bf16.msra.mxu0 %v712
        %2022 = vmatpush.bf16.msra.mxu0 %v710
        %2023 = vmatpush.bf16.msra.mxu0 %v708
        %2024 = vmatpush.bf16.msra.mxu0 %v706
        %2025 = vmatpush.bf16.msra.mxu0 %v704
        %2026 = vmatpush.bf16.msra.mxu0 %v702
        %2027 = vmatmul.bf16.gmra.mxu0 %v1971
        %v2028 = vpop.f32.mrf.mxu0
        %v2029 = vadd.f32 %v2010, %v2028
        %v2030 = vpop.f32.mrf.mxu0
        %v2031 = vadd.f32 %v2012, %v2030
        %2032 = vmatmul.bf16.gmra.mxu0 %v1974
        %v2033 = vpop.f32.mrf.mxu0
        %v2034 = vadd.f32 %v2015, %v2033
        %v2035 = vpop.f32.mrf.mxu0
        %v2036 = vadd.f32 %v2017, %v2035
        %2037 = vdwg.mxu0
        %2038 = vmatpush.bf16.msra.mxu0 %v685
        %2039 = vmatpush.bf16.msra.mxu0 %v683
        %2040 = vmatpush.bf16.msra.mxu0 %v681
        %2041 = vmatpush.bf16.msra.mxu0 %v679
        %2042 = vmatpush.bf16.msra.mxu0 %v677
        %2043 = vmatpush.bf16.msra.mxu0 %v675
        %2044 = vmatpush.bf16.msra.mxu0 %v673
        %2045 = vmatpush.bf16.msra.mxu0 %v671
        %2046 = vmatmul.bf16.gmra.mxu0 %v1969
        %v2047 = vpop.f32.mrf.mxu0
        %v2048 = vadd.f32 %v491, %v2047
        %v2049 = vpop.f32.mrf.mxu0
        %v2050 = vadd.f32 %v491, %v2049
        %2051 = vmatmul.bf16.gmra.mxu0 %v1972
        %v2052 = vpop.f32.mrf.mxu0
        %v2053 = vadd.f32 %v491, %v2052
        %v2054 = vpop.f32.mrf.mxu0
        %v2055 = vadd.f32 %v491, %v2054
        %2056 = vdwg.mxu0
        %2057 = vmatpush.bf16.msra.mxu0 %v701
        %2058 = vmatpush.bf16.msra.mxu0 %v699
        %2059 = vmatpush.bf16.msra.mxu0 %v697
        %2060 = vmatpush.bf16.msra.mxu0 %v695
        %2061 = vmatpush.bf16.msra.mxu0 %v693
        %2062 = vmatpush.bf16.msra.mxu0 %v691
        %2063 = vmatpush.bf16.msra.mxu0 %v689
        %2064 = vmatpush.bf16.msra.mxu0 %v687
        %2065 = vmatmul.bf16.gmra.mxu0 %v1970
        %v2066 = vpop.f32.mrf.mxu0
        %v2067 = vadd.f32 %v2048, %v2066
        %v2068 = vpop.f32.mrf.mxu0
        %v2069 = vadd.f32 %v2050, %v2068
        %2070 = vmatmul.bf16.gmra.mxu0 %v1973
        %v2071 = vpop.f32.mrf.mxu0
        %v2072 = vadd.f32 %v2053, %v2071
        %v2073 = vpop.f32.mrf.mxu0
        %v2074 = vadd.f32 %v2055, %v2073
        %2075 = vdwg.mxu0
        %2076 = vmatpush.bf16.msra.mxu0 %v717
        %2077 = vmatpush.bf16.msra.mxu0 %v715
        %2078 = vmatpush.bf16.msra.mxu0 %v713
        %2079 = vmatpush.bf16.msra.mxu0 %v711
        %2080 = vmatpush.bf16.msra.mxu0 %v709
        %2081 = vmatpush.bf16.msra.mxu0 %v707
        %2082 = vmatpush.bf16.msra.mxu0 %v705
        %2083 = vmatpush.bf16.msra.mxu0 %v703
        %2084 = vmatmul.bf16.gmra.mxu0 %v1971
        %v2085 = vpop.f32.mrf.mxu0
        %v2086 = vadd.f32 %v2067, %v2085
        %v2087 = vpop.f32.mrf.mxu0
        %v2088 = vadd.f32 %v2069, %v2087
        %2089 = vmatmul.bf16.gmra.mxu0 %v1974
        %v2090 = vpop.f32.mrf.mxu0
        %v2091 = vadd.f32 %v2072, %v2090
        %v2092 = vpop.f32.mrf.mxu0
        %v2093 = vadd.f32 %v2074, %v2092
        %2094 = vdwg.mxu0
        %vm2095 = vcmp.gt.f32.partialorder %v2029, 0.0
        %vm2096 = vcmp.gt.f32.partialorder %v2086, 0.0
        %vm2097 = vcmp.gt.f32.partialorder %v2031, 0.0
        %vm2098 = vcmp.gt.f32.partialorder %v2088, 0.0
        %vm2099 = vcmp.gt.f32.partialorder %v2034, 0.0
        %vm2100 = vcmp.gt.f32.partialorder %v2091, 0.0
        %vm2101 = vcmp.gt.f32.partialorder %v2036, 0.0
        %vm2102 = vcmp.gt.f32.partialorder %v2093, 0.0
        %v2103 = vmul.f32 %v2029, 1.442695
        %v2104 = vpow.pop %v2103
        %v2105 = vmul.f32 %v2086, 1.442695
        %v2106 = vpow.pop %v2105
        %v2107 = vmul.f32 %v2031, 1.442695
        %v2108 = vpow.pop %v2107
        %v2109 = vmul.f32 %v2088, 1.442695
        %v2110 = vpow.pop %v2109
        %v2111 = vmul.f32 %v2034, 1.442695
        %v2112 = vpow.pop %v2111
        %v2113 = vmul.f32 %v2091, 1.442695
        %v2114 = vpow.pop %v2113
        %v2115 = vmul.f32 %v2036, 1.442695
        %v2116 = vpow.pop %v2115
        %v2117 = vmul.f32 %v2093, 1.442695
        %v2118 = vpow.pop %v2117
        %v2119 = vsub.f32 %v2104, 1.0
        %v2120 = vsub.f32 %v2106, 1.0
        %v2121 = vsub.f32 %v2108, 1.0
        %v2122 = vsub.f32 %v2110, 1.0
        %v2123 = vsub.f32 %v2112, 1.0
        %v2124 = vsub.f32 %v2114, 1.0
        %v2125 = vsub.f32 %v2116, 1.0
        %v2126 = vsub.f32 %v2118, 1.0
        %v2127 = vsel %vm2095, %v2029, %v2119
        %v2128 = vsel %vm2096, %v2086, %v2120
        %v2129 = vsel %vm2097, %v2031, %v2121
        %v2130 = vsel %vm2098, %v2088, %v2122
        %v2131 = vsel %vm2099, %v2034, %v2123
        %v2132 = vsel %vm2100, %v2091, %v2124
        %v2133 = vsel %vm2101, %v2036, %v2125
        %v2134 = vsel %vm2102, %v2093, %v2126
        %v2135 = vpack.c.bf16 %v2129, %v2127
        %v2136 = vpack.c.bf16 %v2130, %v2128
        %v2137 = vpack.c.bf16 %v2133, %v2131
        %v2138 = vpack.c.bf16 %v2134, %v2132
        %2139 = vmatpush.bf16.msra.mxu0 %v998
        %2140 = vmatpush.bf16.msra.mxu0 %v997
        %2141 = vmatpush.bf16.msra.mxu0 %v996
        %2142 = vmatpush.bf16.msra.mxu0 %v995
        %2143 = vmatpush.bf16.msra.mxu0 %v994
        %2144 = vmatpush.bf16.msra.mxu0 %v993
        %2145 = vmatpush.bf16.msra.mxu0 %v992
        %2146 = vmatpush.bf16.msra.mxu0 %v991
        %2147 = vmatmul.bf16.gmra.mxu0 %v2135
        %v2148 = vpop.f32.mrf.mxu0
        %v2149 = vadd.f32 %v925, %v2148
        %v2150 = vpop.f32.mrf.mxu0
        %v2151 = vadd.f32 %v925, %v2150
        %2152 = vmatmul.bf16.gmra.mxu0 %v2137
        %v2153 = vpop.f32.mrf.mxu0
        %v2154 = vadd.f32 %v925, %v2153
        %v2155 = vpop.f32.mrf.mxu0
        %v2156 = vadd.f32 %v925, %v2155
        %2157 = vdwg.mxu0
        %2158 = vmatpush.bf16.msra.mxu0 %v1006
        %2159 = vmatpush.bf16.msra.mxu0 %v1005
        %2160 = vmatpush.bf16.msra.mxu0 %v1004
        %2161 = vmatpush.bf16.msra.mxu0 %v1003
        %2162 = vmatpush.bf16.msra.mxu0 %v1002
        %2163 = vmatpush.bf16.msra.mxu0 %v1001
        %2164 = vmatpush.bf16.msra.mxu0 %v1000
        %2165 = vmatpush.bf16.msra.mxu0 %v999
        %2166 = vmatmul.bf16.gmra.mxu0 %v2136
        %v2167 = vpop.f32.mrf.mxu0
        %v2168 = vadd.f32 %v2149, %v2167
        %v2169 = vpop.f32.mrf.mxu0
        %v2170 = vadd.f32 %v2151, %v2169
        %2171 = vmatmul.bf16.gmra.mxu0 %v2138
        %v2172 = vpop.f32.mrf.mxu0
        %v2173 = vadd.f32 %v2154, %v2172
        %v2174 = vpop.f32.mrf.mxu0
        %v2175 = vadd.f32 %v2156, %v2174
        %2176 = vdwg.mxu0
        %vm2177 = vcmp.gt.f32.partialorder %v2168, 0.0
        %vm2178 = vcmp.gt.f32.partialorder %v2170, 0.0
        %vm2179 = vcmp.gt.f32.partialorder %v2173, 0.0
        %vm2180 = vcmp.gt.f32.partialorder %v2175, 0.0
        %v2181 = vmul.f32 %v2168, 1.442695
        %v2182 = vpow.pop %v2181
        %v2183 = vmul.f32 %v2170, 1.442695
        %v2184 = vpow.pop %v2183
        %v2185 = vmul.f32 %v2173, 1.442695
        %v2186 = vpow.pop %v2185
        %v2187 = vmul.f32 %v2175, 1.442695
        %v2188 = vpow.pop %v2187
        %v2189 = vsub.f32 %v2182, 1.0
        %v2190 = vsub.f32 %v2184, 1.0
        %v2191 = vsub.f32 %v2186, 1.0
        %v2192 = vsub.f32 %v2188, 1.0
        %v2193 = vsel %vm2177, %v2168, %v2189
        %v2194 = vsel %vm2178, %v2170, %v2190
        %v2195 = vsel %vm2179, %v2173, %v2191
        %v2196 = vsel %vm2180, %v2175, %v2192
        %v2197 = vpack.c.bf16 %v2194, %v2193
        %v2198 = vpack.c.bf16 %v2196, %v2195
        %2199 = vmatpush.bf16.msra.mxu0 %v1191
        %2200 = vmatpush.bf16.msra.mxu0 %v1188
        %2201 = vmatpush.bf16.msra.mxu0 %v1185
        %2202 = vmatpush.bf16.msra.mxu0 %v1182
        %2203 = vmatpush.bf16.msra.mxu0 %v1179
        %2204 = vmatpush.bf16.msra.mxu0 %v1176
        %2205 = vmatpush.bf16.msra.mxu0 %v1173
        %2206 = vmatpush.bf16.msra.mxu0 %v1170
        %2207 = vmatmul.bf16.gmra.mxu0 %v2197
        %v2208 = vpop.f32.mrf.mxu0
        %v2209 = vadd.f32 %v1084, %v2208
        %v2210 = vpop.f32.mrf.mxu0
        %v2211 = vadd.f32 %v1084, %v2210
        %2212 = vmatmul.bf16.gmra.mxu0 %v2198
        %v2213 = vpop.f32.mrf.mxu0
        %v2214 = vadd.f32 %v1084, %v2213
        %v2215 = vpop.f32.mrf.mxu0
        %v2216 = vadd.f32 %v1084, %v2215
        %2217 = vdwg.mxu0
        %2218 = vmatpush.bf16.msra.mxu0 %v1192
        %2219 = vmatpush.bf16.msra.mxu0 %v1189
        %2220 = vmatpush.bf16.msra.mxu0 %v1186
        %2221 = vmatpush.bf16.msra.mxu0 %v1183
        %2222 = vmatpush.bf16.msra.mxu0 %v1180
        %2223 = vmatpush.bf16.msra.mxu0 %v1177
        %2224 = vmatpush.bf16.msra.mxu0 %v1174
        %2225 = vmatpush.bf16.msra.mxu0 %v1171
        %2226 = vmatmul.bf16.gmra.mxu0 %v2197
        %v2227 = vpop.f32.mrf.mxu0
        %v2228 = vadd.f32 %v1085, %v2227
        %v2229 = vpop.f32.mrf.mxu0
        %v2230 = vadd.f32 %v1085, %v2229
        %2231 = vmatmul.bf16.gmra.mxu0 %v2198
        %v2232 = vpop.f32.mrf.mxu0
        %v2233 = vadd.f32 %v1085, %v2232
        %v2234 = vpop.f32.mrf.mxu0
        %v2235 = vadd.f32 %v1085, %v2234
        %2236 = vdwg.mxu0
        %2237 = vmatpush.bf16.msra.mxu0 %v1193
        %2238 = vmatpush.bf16.msra.mxu0 %v1190
        %2239 = vmatpush.bf16.msra.mxu0 %v1187
        %2240 = vmatpush.bf16.msra.mxu0 %v1184
        %2241 = vmatpush.bf16.msra.mxu0 %v1181
        %2242 = vmatpush.bf16.msra.mxu0 %v1178
        %2243 = vmatpush.bf16.msra.mxu0 %v1175
        %2244 = vmatpush.bf16.msra.mxu0 %v1172
        %2245 = vmatmul.bf16.gmra.mxu0 %v2197
        %v2246 = vpop.f32.mrf.mxu0
        %v2247 = vadd.f32 %v1086, %v2246
        %v2248 = vpop.f32.mrf.mxu0
        %v2249 = vadd.f32 %v1086, %v2248
        %2250 = vmatmul.bf16.gmra.mxu0 %v2198
        %v2251 = vpop.f32.mrf.mxu0
        %v2252 = vadd.f32 %v1086, %v2251
        %v2253 = vpop.f32.mrf.mxu0
        %v2254 = vadd.f32 %v1086, %v2253
        %2255 = vdwg.mxu0
        %2256 = vst [vmem:[%s363 + $0x120] sm:$0xff] %v2209
        %2257 = vst [vmem:[%s363 + $0x128] sm:$0xff] %v2228
        %2258 = vst [vmem:[%s363 + $0x130] sm:$0xff] %v2247
        %2259 = vst [vmem:[%s363 + $0x138] sm:$0xff] %v2211
        %2260 = vst [vmem:[%s363 + $0x140] sm:$0xff] %v2230
        %2261 = vst [vmem:[%s363 + $0x148] sm:$0xff] %v2249
        %2262 = vst [vmem:[%s363 + $0x150] sm:$0xff] %v2214
        %2263 = vst [vmem:[%s363 + $0x158] sm:$0xff] %v2233
        %2264 = vst [vmem:[%s363 + $0x160] sm:$0xff] %v2252
        %2265 = vst [vmem:[%s363 + $0x168] sm:$0xff] %v2216
        %2266 = vst [vmem:[%s363 + $0x170] sm:$0xff] %v2235
        %2267 = vst [vmem:[%s363 + $0x178] sm:$0xff] %v2254
        %s2268 = sand.u32 %s186, 1
        %s2269 = scalar_lea.sflag [#allocation4], %s2268
        %s2270 = sand.u32 %s186, 1
        %s2271 = smul.addr %s2270, 384
        %s2272 = scalar_lea.vmem [#allocation11], %s2271
        // Predicated region
        $region69: #{tpu_custom_call.1} parent=47 // pred_check
          %p2273 = pneg %p196
        $region70: #{tpu_custom_call.1} parent=47 // pred_check_branch
          %2275 = sbr.rel (%p2273) target = $region72
        $region71: #{tpu_custom_call.1} parent=47 // pred_region
          %s2276 = smul.u32 16, %s26
          %2278 = vsyncadd %s2269, 0
          %s2279 = smul.addr %s2276, 3
          %s2280 = smul.addr %s2279, 8
          %s2281 = scalar_lea.hbm %s7, %s2280
          %s2282 = sshll.u32 %s2272, 4
          %s2283 = int_to_ptr.vmem [resolvable:$true] %s2282
          %s2284 = sshll.u32 %s2281, 4
          %s2285 = int_to_ptr.hbm [resolvable:$true] %s2284
          %2290 = dma.vmem_to_hbm [thread:$0]  %s2283, 6144, %s2285, %s2269, 384, 384, 24
        $region72: #{tpu_custom_call.1} parent=47 // pred_fallthru
          _
      $region48: #{tpu_custom_call.1} parent=5 // pred_fallthru
        _
      %p2291 = scmp.le.s32.totalorder 2, %s21
      // Predicated region
      $region73: #{tpu_custom_call.1} parent=5 // pred_check
        %p2292 = pneg %p2291
      $region74: #{tpu_custom_call.1} parent=5 // pred_check_branch
        %2294 = sbr.rel (%p2292) target = $region76
      $region75: #{tpu_custom_call.1} parent=5 // pred_region
        %s2295 = ssub.s32 %s21, 2
        // Predicated region
        $region77: #{tpu_custom_call.1} parent=75 // pred_check
          %p2296 = pneg %p202
        $region78: #{tpu_custom_call.1} parent=75 // pred_check_branch
          %2298 = sbr.rel (%p2296) target = $region80
        $region79: #{tpu_custom_call.1} parent=75 // pred_region
          %s2299 = sand.u32 %s187, 1
          %s2300 = scalar_lea.sflag [#allocation4], %s2299
          %s2301 = sand.u32 %s187, 1
          %s2302 = smul.addr %s2301, 384
          %s2303 = scalar_lea.vmem [#allocation11], %s2302
          %2305 = dma.done %s2300, 6144
        $region80: #{tpu_custom_call.1} parent=75 // pred_fallthru
          _
      $region76: #{tpu_custom_call.1} parent=5 // pred_fallthru
        _
    $region6: #{tpu_custom_call.1} parent=1 // loop_footer
      %s25 = sadd.s32 1, %s21
    $region7: #{tpu_custom_call.1} parent=1 // loop_footer_branch
      %20 = sbr.rel target = $region3
    $region8: #{tpu_custom_call.1} parent=1 // loop_exit
      _
    %2306 = vsyncpa [#allocation3], 1
    %s2307 = scalar_lea.sflag [#allocation3], 1
    %2308 = vsyncpa %s2307, 1
    %2309 = vsyncpa [#allocation6], 1
    %2310 = vsyncpa [#allocation9], 1
    %2311 = vsyncpa [#allocation4], 1
    %s2312 = scalar_lea.sflag [#allocation4], 1
    %2313 = vsyncpa %s2312, 1

</llo_original>
